<compile_context>
chip_gen: v7x
topology: tpu7x:2x2x1
jax: 0.10.0
libtpu: 0.0.40
codegen_flags: <defaults>
</compile_context>

<pallas_src>
import functools
import math

import jax
import jax.numpy as jnp
from jax.experimental import pallas as pl
from jax.experimental.pallas import tpu as pltpu


def _layer_norm(v, w, b, eps=1e-5):
    mu = jnp.mean(v, axis=-1, keepdims=True)
    var = jnp.mean((v - mu) ** 2, axis=-1, keepdims=True)
    return (v - mu) * jax.lax.rsqrt(var + eps) * w + b


def _transformer_layer_kernel(
    x_ref, ln_w_ref, ln_b_ref, wq_ref, wk_ref, wv_ref, wo_ref, bo_ref,
    w1_ref, b1_ref, w2_ref, b2_ref,
    out_ref, attn_ref,
    *, block_b, heads, dim_head,
):
    compute_dtype = wq_ref.dtype           # bf16 weights -> bf16 MXU inputs
    n = x_ref.shape[1]
    d = x_ref.shape[2]
    m = block_b * n
    inner = heads * dim_head

    # fold (batch block, sequence) into one MXU M dimension
    x = x_ref[...].astype(jnp.float32).reshape(m, d)
    ln_w = ln_w_ref[...]                   # (1, D) f32
    ln_b = ln_b_ref[...]

    # ---------- attention branch (pre-norm) ----------
    h = _layer_norm(x, ln_w, ln_b).astype(compute_dtype)
    # Wq already carries the 1/sqrt(dh) factor (folded on the host).
    q = jnp.dot(h, wq_ref[...], preferred_element_type=jnp.float32)   # (M, inner)
    k = jnp.dot(h, wk_ref[...], preferred_element_type=jnp.float32)
    v = jnp.dot(h, wv_ref[...], preferred_element_type=jnp.float32)

    q3 = q.reshape(block_b, n, inner).astype(compute_dtype)
    k3 = k.reshape(block_b, n, inner).astype(compute_dtype)
    v3 = v.reshape(block_b, n, inner).astype(compute_dtype)

    attn_heads = []
    out_heads = []
    for hd in range(heads):                # static, fully unrolled (heads is small)
        lo = hd * dim_head
        qh = q3[:, :, lo:lo + dim_head]
        kh = k3[:, :, lo:lo + dim_head]
        vh = v3[:, :, lo:lo + dim_head]
        # batched over the whole batch block per head
        s = jnp.einsum('bid,bjd->bij', qh, kh,
                       preferred_element_type=jnp.float32)            # (block_b, N, N)
        s_max = jnp.max(s, axis=-1, keepdims=True)
        e = jnp.exp(s - s_max)                                         # EUP
        inv = pl.reciprocal(jnp.sum(e, axis=-1, keepdims=True), approx=True)
        a = e * inv                                                    # softmax(dim=-1)
        attn_heads.append(a)
        o_h = jnp.einsum('bij,bjd->bid', a.astype(compute_dtype), vh,
                         preferred_element_type=jnp.float32)           # (block_b, N, dh)
        out_heads.append(o_h.reshape(m, dim_head))

    # single store of the attention probabilities for the whole batch block
    attn_ref[...] = jnp.stack(attn_heads, axis=1).astype(attn_ref.dtype)

    # one output projection with contraction over the FULL inner dim (better MXU
    # K-utilization than `heads` separate dots with K = dim_head).
    o_cat = jnp.concatenate(out_heads, axis=-1).astype(compute_dtype)  # (M, inner)
    attn_out = jnp.dot(o_cat, wo_ref[...], preferred_element_type=jnp.float32)
    x = x + attn_out + bo_ref[...]

    # ---------- feed-forward branch (pre-norm, same shared LayerNorm) ----------
    h = _layer_norm(x, ln_w, ln_b).astype(compute_dtype)
    f = jnp.dot(h, w1_ref[...], preferred_element_type=jnp.float32) + b1_ref[...]
    # exact GELU (nn.GELU default).  A tanh-approx GELU would move this onto the
    # EUP slot on v6e, but it changes numerics vs the PyTorch module, so keep erf.
    f = 0.5 * f * (1.0 + jax.lax.erf(f * (1.0 / math.sqrt(2.0))))
    f = jnp.dot(f.astype(compute_dtype), w2_ref[...],
                preferred_element_type=jnp.float32) + b2_ref[...]

    out_ref[...] = (x + f).reshape(block_b, n, d).astype(out_ref.dtype)


def _pick_block_b(batch, seq, target_rows=512):
    """Largest divisor of `batch` whose folded M (= block_b*seq) stays <= target.

    Intent: give the QKV/FFN matmuls an M of a few hundred rows when the batch
    allows it (bigger tiles amortize the ~0.35us per-grid-step overhead), while
    keeping at least one grid step per batch block.  The (block_b, H, N, N)
    attention-prob block is the VMEM limiter at long sequence lengths.
    """
    best = 1
    for cand in range(1, batch + 1):
        if batch % cand == 0 and cand * seq <= max(target_rows, seq):
            best = cand
    return best


def transformer_layer(x, params, *, heads, dim_head, block_b=None):
    B, N, D = x.shape
    inner = heads * dim_head
    mlp_dim = params["w1"].shape[1]
    scale = dim_head ** (-0.5)
    if block_b is None:
        block_b = _pick_block_b(B, N)
    assert B % block_b == 0

    # bf16 matmul operands (f32 accumulate inside the kernel); norm/bias in f32.
    # The attention scale is folded into Wq here (fused with the cast), so the
    # kernel never multiplies by it.
    bf16 = jnp.bfloat16
    wq = (params["wq"] * scale).astype(bf16)
    wk = params["wk"].astype(bf16)
    wv = params["wv"].astype(bf16)
    wo = params["wo"].astype(bf16)
    w1 = params["w1"].astype(bf16)
    w2 = params["w2"].astype(bf16)
    ln_w = params["ln_w"].astype(jnp.float32)
    ln_b = params["ln_b"].astype(jnp.float32)
    bo = params["bo"].astype(jnp.float32)
    b1 = params["b1"].astype(jnp.float32)
    b2 = params["b2"].astype(jnp.float32)

    def resident(shape):
        # constant index_map: same block every grid step -> stays resident in VMEM.
        rank = len(shape)
        return pl.BlockSpec(shape, lambda g, rank=rank: (0,) * rank)

    kernel = functools.partial(
        _transformer_layer_kernel,
        block_b=block_b, heads=heads, dim_head=dim_head)

    out_shape = (
        jax.ShapeDtypeStruct((B, N, D), jnp.float32),
        jax.ShapeDtypeStruct((B, heads, N, N), jnp.float32),
    )
    in_specs = [
        pl.BlockSpec((block_b, N, D), lambda g: (g, 0, 0)),      # x
        resident((1, D)), resident((1, D)),                      # ln_w, ln_b
        resident((D, inner)), resident((D, inner)), resident((D, inner)),
        resident((inner, D)), resident((1, D)),                  # wo, bo
        resident((D, mlp_dim)), resident((1, mlp_dim)),          # w1, b1
        resident((mlp_dim, D)), resident((1, D)),                # w2, b2
    ]
    out_specs = (
        pl.BlockSpec((block_b, N, D), lambda g: (g, 0, 0)),
        pl.BlockSpec((block_b, heads, N, N), lambda g: (g, 0, 0, 0)),
    )
    return pl.pallas_call(
        kernel,
        out_shape=out_shape,
        grid_spec=pltpu.PrefetchScalarGridSpec(
            num_scalar_prefetch=0,
            grid=(B // block_b,),
            in_specs=in_specs,
            out_specs=out_specs,
        ),
        compiler_params=pltpu.CompilerParams(
            dimension_semantics=("parallel",),
            vmem_limit_bytes=64 * 1024 * 1024,   # explicit, not the scoped default
        ),
    )(x, ln_w, ln_b, wq, wk, wv, wo, bo, w1, b1, w2, b2)


def _reference(x, p, heads, dim_head):
    # pure-JAX f32 reference of the same forward pass (for a correctness check)
    def ln(v):
        mu = v.mean(-1, keepdims=True)
        var = ((v - mu) ** 2).mean(-1, keepdims=True)
        return (v - mu) / jnp.sqrt(var + 1e-5) * p["ln_w"][0] + p["ln_b"][0]

    B, N, D = x.shape
    h = ln(x)
    q = (h @ p["wq"]).reshape(B, N, heads, dim_head).transpose(0, 2, 1, 3)
    k = (h @ p["wk"]).reshape(B, N, heads, dim_head).transpose(0, 2, 1, 3)
    v = (h @ p["wv"]).reshape(B, N, heads, dim_head).transpose(0, 2, 1, 3)
    dots = jnp.einsum("bhid,bhjd->bhij", q, k) * (dim_head ** -0.5)
    a = jax.nn.softmax(dots, axis=-1)
    o = jnp.einsum("bhij,bhjd->bhid", a, v).transpose(0, 2, 1, 3).reshape(B, N, -1)
    o = o @ p["wo"] + p["bo"][0]
    x = o + x
    h = ln(x)
    f = h @ p["w1"] + p["b1"][0]
    f = 0.5 * f * (1.0 + jax.lax.erf(f / jnp.sqrt(2.0)))
    f = f @ p["w2"] + p["b2"][0]
    return x + f, a


if __name__ == "__main__":
    B, N, D = 2, 8, 32
    heads, dim_head, mlp_dim = 4, 8, 64
    inner = heads * dim_head

    key = jax.random.PRNGKey(0)
    ks = jax.random.split(key, 12)
    f32 = jnp.float32
    params = {
        "ln_w": 1.0 + 0.05 * jax.random.normal(ks[0], (1, D), f32),
        "ln_b": 0.05 * jax.random.normal(ks[1], (1, D), f32),
        "wq": 0.05 * jax.random.normal(ks[2], (D, inner), f32),
        "wk": 0.05 * jax.random.normal(ks[3], (D, inner), f32),
        "wv": 0.05 * jax.random.normal(ks[4], (D, inner), f32),
        "wo": 0.05 * jax.random.normal(ks[5], (inner, D), f32),
        "bo": 0.05 * jax.random.normal(ks[6], (1, D), f32),
        "w1": 0.05 * jax.random.normal(ks[7], (D, mlp_dim), f32),
        "b1": 0.05 * jax.random.normal(ks[8], (1, mlp_dim), f32),
        "w2": 0.05 * jax.random.normal(ks[9], (mlp_dim, D), f32),
        "b2": 0.05 * jax.random.normal(ks[10], (1, D), f32),
    }
    x = jax.random.normal(ks[11], (B, N, D), f32)

    out, attn = transformer_layer(x, params, heads=heads, dim_head=dim_head)
    jax.block_until_ready((out, attn))

    ref_out, ref_attn = _reference(x, params, heads, dim_head)
    assert out.shape == (B, N, D) and attn.shape == (B, heads, N, N)
    # Kernel uses bf16 matmul operands (f32 accumulate) and an approx reciprocal
    # in the softmax, so compare against the f32 reference with mixed-precision
    # tolerances.
    assert jnp.allclose(out, ref_out, atol=4e-2, rtol=4e-2)
    assert jnp.allclose(attn, ref_attn, atol=1e-2, rtol=1e-2)
    print("KERNEL_OK")
</pallas_src>

<mosaic_0001>
module attributes {stable_mosaic.version = 11 : i64} {
  func.func @_transformer_layer_kernel(%arg0: i32, %arg1: memref<2x8x32xf32, #tpu.memory_space<vmem>>, %arg2: memref<1x32xf32, #tpu.memory_space<vmem>>, %arg3: memref<1x32xf32, #tpu.memory_space<vmem>>, %arg4: memref<32x32xbf16, #tpu.memory_space<vmem>>, %arg5: memref<32x32xbf16, #tpu.memory_space<vmem>>, %arg6: memref<32x32xbf16, #tpu.memory_space<vmem>>, %arg7: memref<32x32xbf16, #tpu.memory_space<vmem>>, %arg8: memref<1x32xf32, #tpu.memory_space<vmem>>, %arg9: memref<32x64xbf16, #tpu.memory_space<vmem>>, %arg10: memref<1x64xf32, #tpu.memory_space<vmem>>, %arg11: memref<64x32xbf16, #tpu.memory_space<vmem>>, %arg12: memref<1x32xf32, #tpu.memory_space<vmem>>, %arg13: memref<2x8x32xf32, #tpu.memory_space<vmem>>, %arg14: memref<2x4x8x8xf32, #tpu.memory_space<vmem>>) attributes {dimension_semantics = [#tpu.dimension_semantics<parallel>], iteration_bounds = array<i64: 1>, scalar_prefetch = 0 : i64, scratch_operands = 0 : i64, tpu.core_type = #tpu.core_type<tc>, window_params = [{transform_indices = @transform_0, window_bounds = array<i64: 2, 8, 32>}, {pipeline_mode = #tpu.pipeline_mode<synchronous>, transform_indices = @transform_1, window_bounds = array<i64: 1, 32>}, {pipeline_mode = #tpu.pipeline_mode<synchronous>, transform_indices = @transform_2, window_bounds = array<i64: 1, 32>}, {pipeline_mode = #tpu.pipeline_mode<synchronous>, transform_indices = @transform_3, window_bounds = array<i64: 32, 32>}, {pipeline_mode = #tpu.pipeline_mode<synchronous>, transform_indices = @transform_4, window_bounds = array<i64: 32, 32>}, {pipeline_mode = #tpu.pipeline_mode<synchronous>, transform_indices = @transform_5, window_bounds = array<i64: 32, 32>}, {pipeline_mode = #tpu.pipeline_mode<synchronous>, transform_indices = @transform_6, window_bounds = array<i64: 32, 32>}, {pipeline_mode = #tpu.pipeline_mode<synchronous>, transform_indices = @transform_7, window_bounds = array<i64: 1, 32>}, {pipeline_mode = #tpu.pipeline_mode<synchronous>, transform_indices = @transform_8, window_bounds = array<i64: 32, 64>}, {pipeline_mode = #tpu.pipeline_mode<synchronous>, transform_indices = @transform_9, window_bounds = array<i64: 1, 64>}, {pipeline_mode = #tpu.pipeline_mode<synchronous>, transform_indices = @transform_10, window_bounds = array<i64: 64, 32>}, {pipeline_mode = #tpu.pipeline_mode<synchronous>, transform_indices = @transform_11, window_bounds = array<i64: 1, 32>}, {transform_indices = @transform_12, window_bounds = array<i64: 2, 8, 32>}, {transform_indices = @transform_13, window_bounds = array<i64: 2, 4, 8, 8>}]} {
    %c0 = arith.constant 0 : index
    %c0_0 = arith.constant 0 : index
    %c0_1 = arith.constant 0 : index
    %0 = vector.load %arg1[%c0, %c0_0, %c0_1] : memref<2x8x32xf32, #tpu.memory_space<vmem>>, vector<2x8x32xf32>
    %1 = vector.shape_cast %0 : vector<2x8x32xf32> to vector<16x32xf32>
    %c0_2 = arith.constant 0 : index
    %c0_3 = arith.constant 0 : index
    %2 = vector.load %arg2[%c0_2, %c0_3] : memref<1x32xf32, #tpu.memory_space<vmem>>, vector<1x32xf32>
    %c0_4 = arith.constant 0 : index
    %c0_5 = arith.constant 0 : index
    %3 = vector.load %arg3[%c0_4, %c0_5] : memref<1x32xf32, #tpu.memory_space<vmem>>, vector<1x32xf32>
    %cst = arith.constant dense<0.000000e+00> : vector<16xf32>
    %4 = vector.multi_reduction <add>, %1, %cst [1] : vector<16x32xf32> to vector<16xf32>
    %5 = vector.shape_cast %4 : vector<16xf32> to vector<16x1xf32>
    %cst_6 = arith.constant 3.200000e+01 : f32
    %6 = vector.broadcast %cst_6 : f32 to vector<16x1xf32>
    %7 = arith.divf %5, %6 : vector<16x1xf32>
    %8 = vector.broadcast %7 : vector<16x1xf32> to vector<16x32xf32>
    %9 = arith.subf %1, %8 : vector<16x32xf32>
    %10 = arith.mulf %9, %9 : vector<16x32xf32>
    %cst_7 = arith.constant dense<0.000000e+00> : vector<16xf32>
    %11 = vector.multi_reduction <add>, %10, %cst_7 [1] : vector<16x32xf32> to vector<16xf32>
    %12 = vector.shape_cast %11 : vector<16xf32> to vector<16x1xf32>
    %cst_8 = arith.constant 3.200000e+01 : f32
    %13 = vector.broadcast %cst_8 : f32 to vector<16x1xf32>
    %14 = arith.divf %12, %13 : vector<16x1xf32>
    %15 = vector.broadcast %7 : vector<16x1xf32> to vector<16x32xf32>
    %16 = arith.subf %1, %15 : vector<16x32xf32>
    %cst_9 = arith.constant 9.99999974E-6 : f32
    %17 = vector.broadcast %cst_9 : f32 to vector<16x1xf32>
    %18 = arith.addf %14, %17 : vector<16x1xf32>
    %19 = math.rsqrt %18 : vector<16x1xf32>
    %20 = vector.broadcast %19 : vector<16x1xf32> to vector<16x32xf32>
    %21 = arith.mulf %16, %20 : vector<16x32xf32>
    %22 = vector.broadcast %2 : vector<1x32xf32> to vector<16x32xf32>
    %23 = arith.mulf %21, %22 : vector<16x32xf32>
    %24 = vector.broadcast %3 : vector<1x32xf32> to vector<16x32xf32>
    %25 = arith.addf %23, %24 : vector<16x32xf32>
    %26 = arith.truncf %25 : vector<16x32xf32> to vector<16x32xbf16>
    %c0_10 = arith.constant 0 : index
    %c0_11 = arith.constant 0 : index
    %27 = vector.load %arg4[%c0_10, %c0_11] : memref<32x32xbf16, #tpu.memory_space<vmem>>, vector<32x32xbf16>
    %cst_12 = arith.constant dense<0.000000e+00> : vector<16x32xf32>
    %28 = tpu.matmul %26, %27, %cst_12 {dimension_numbers = #tpu.dot_dimension_numbers<[1], [0], [0], [1], [0, 0, 1, 1], [], []>} : vector<16x32xbf16>, vector<32x32xbf16>, vector<16x32xf32> -> vector<16x32xf32>
    %c0_13 = arith.constant 0 : index
    %c0_14 = arith.constant 0 : index
    %29 = vector.load %arg5[%c0_13, %c0_14] : memref<32x32xbf16, #tpu.memory_space<vmem>>, vector<32x32xbf16>
    %cst_15 = arith.constant dense<0.000000e+00> : vector<16x32xf32>
    %30 = tpu.matmul %26, %29, %cst_15 {dimension_numbers = #tpu.dot_dimension_numbers<[1], [0], [0], [1], [0, 0, 1, 1], [], []>} : vector<16x32xbf16>, vector<32x32xbf16>, vector<16x32xf32> -> vector<16x32xf32>
    %c0_16 = arith.constant 0 : index
    %c0_17 = arith.constant 0 : index
    %31 = vector.load %arg6[%c0_16, %c0_17] : memref<32x32xbf16, #tpu.memory_space<vmem>>, vector<32x32xbf16>
    %cst_18 = arith.constant dense<0.000000e+00> : vector<16x32xf32>
    %32 = tpu.matmul %26, %31, %cst_18 {dimension_numbers = #tpu.dot_dimension_numbers<[1], [0], [0], [1], [0, 0, 1, 1], [], []>} : vector<16x32xbf16>, vector<32x32xbf16>, vector<16x32xf32> -> vector<16x32xf32>
    %33 = vector.shape_cast %28 : vector<16x32xf32> to vector<2x8x32xf32>
    %34 = arith.truncf %33 : vector<2x8x32xf32> to vector<2x8x32xbf16>
    %35 = vector.shape_cast %30 : vector<16x32xf32> to vector<2x8x32xf32>
    %36 = arith.truncf %35 : vector<2x8x32xf32> to vector<2x8x32xbf16>
    %37 = vector.shape_cast %32 : vector<16x32xf32> to vector<2x8x32xf32>
    %38 = arith.truncf %37 : vector<2x8x32xf32> to vector<2x8x32xbf16>
    %39 = vector.extract_strided_slice %34 {offsets = [0, 0, 0], sizes = [2, 8, 8], strides = [1, 1, 1]} : vector<2x8x32xbf16> to vector<2x8x8xbf16>
    %40 = vector.extract_strided_slice %36 {offsets = [0, 0, 0], sizes = [2, 8, 8], strides = [1, 1, 1]} : vector<2x8x32xbf16> to vector<2x8x8xbf16>
    %41 = vector.extract_strided_slice %38 {offsets = [0, 0, 0], sizes = [2, 8, 8], strides = [1, 1, 1]} : vector<2x8x32xbf16> to vector<2x8x8xbf16>
    "tpu.trace_start"() <{level = 10 : i32, message = "bid,bjd->bij"}> : () -> ()
    %cst_19 = arith.constant dense<0.000000e+00> : vector<2x8x8xf32>
    %42 = tpu.matmul %39, %40, %cst_19 {dimension_numbers = #tpu.dot_dimension_numbers<[2], [2], [1], [1], [0, 0, 0, 1, 1, 1], [0], [0]>} : vector<2x8x8xbf16>, vector<2x8x8xbf16>, vector<2x8x8xf32> -> vector<2x8x8xf32>
    "tpu.trace_stop"() : () -> ()
    %cst_20 = arith.constant dense<0xFF800000> : vector<2x8xf32>
    %43 = vector.multi_reduction <maximumf>, %42, %cst_20 [2] : vector<2x8x8xf32> to vector<2x8xf32>
    %44 = vector.shape_cast %43 : vector<2x8xf32> to vector<2x8x1xf32>
    %45 = vector.broadcast %44 : vector<2x8x1xf32> to vector<2x8x8xf32>
    %46 = arith.subf %42, %45 : vector<2x8x8xf32>
    %47 = math.exp %46 : vector<2x8x8xf32>
    %cst_21 = arith.constant dense<0.000000e+00> : vector<2x8xf32>
    %48 = vector.multi_reduction <add>, %47, %cst_21 [2] : vector<2x8x8xf32> to vector<2x8xf32>
    %49 = vector.shape_cast %48 : vector<2x8xf32> to vector<2x8x1xf32>
    %50 = tpu.reciprocal %49 {approx = true} : vector<2x8x1xf32> -> vector<2x8x1xf32>
    %51 = vector.broadcast %50 : vector<2x8x1xf32> to vector<2x8x8xf32>
    %52 = arith.mulf %47, %51 : vector<2x8x8xf32>
    %53 = arith.truncf %52 : vector<2x8x8xf32> to vector<2x8x8xbf16>
    "tpu.trace_start"() <{level = 10 : i32, message = "bij,bjd->bid"}> : () -> ()
    %cst_22 = arith.constant dense<0.000000e+00> : vector<2x8x8xf32>
    %54 = tpu.matmul %53, %41, %cst_22 {dimension_numbers = #tpu.dot_dimension_numbers<[2], [1], [1], [2], [0, 0, 0, 1, 1, 2], [0], [0]>} : vector<2x8x8xbf16>, vector<2x8x8xbf16>, vector<2x8x8xf32> -> vector<2x8x8xf32>
    "tpu.trace_stop"() : () -> ()
    %55 = vector.shape_cast %54 : vector<2x8x8xf32> to vector<16x8xf32>
    %56 = vector.extract_strided_slice %34 {offsets = [0, 0, 8], sizes = [2, 8, 8], strides = [1, 1, 1]} : vector<2x8x32xbf16> to vector<2x8x8xbf16>
    %57 = vector.extract_strided_slice %36 {offsets = [0, 0, 8], sizes = [2, 8, 8], strides = [1, 1, 1]} : vector<2x8x32xbf16> to vector<2x8x8xbf16>
    %58 = vector.extract_strided_slice %38 {offsets = [0, 0, 8], sizes = [2, 8, 8], strides = [1, 1, 1]} : vector<2x8x32xbf16> to vector<2x8x8xbf16>
    "tpu.trace_start"() <{level = 10 : i32, message = "bid,bjd->bij"}> : () -> ()
    %cst_23 = arith.constant dense<0.000000e+00> : vector<2x8x8xf32>
    %59 = tpu.matmul %56, %57, %cst_23 {dimension_numbers = #tpu.dot_dimension_numbers<[2], [2], [1], [1], [0, 0, 0, 1, 1, 1], [0], [0]>} : vector<2x8x8xbf16>, vector<2x8x8xbf16>, vector<2x8x8xf32> -> vector<2x8x8xf32>
    "tpu.trace_stop"() : () -> ()
    %cst_24 = arith.constant dense<0xFF800000> : vector<2x8xf32>
    %60 = vector.multi_reduction <maximumf>, %59, %cst_24 [2] : vector<2x8x8xf32> to vector<2x8xf32>
    %61 = vector.shape_cast %60 : vector<2x8xf32> to vector<2x8x1xf32>
    %62 = vector.broadcast %61 : vector<2x8x1xf32> to vector<2x8x8xf32>
    %63 = arith.subf %59, %62 : vector<2x8x8xf32>
    %64 = math.exp %63 : vector<2x8x8xf32>
    %cst_25 = arith.constant dense<0.000000e+00> : vector<2x8xf32>
    %65 = vector.multi_reduction <add>, %64, %cst_25 [2] : vector<2x8x8xf32> to vector<2x8xf32>
    %66 = vector.shape_cast %65 : vector<2x8xf32> to vector<2x8x1xf32>
    %67 = tpu.reciprocal %66 {approx = true} : vector<2x8x1xf32> -> vector<2x8x1xf32>
    %68 = vector.broadcast %67 : vector<2x8x1xf32> to vector<2x8x8xf32>
    %69 = arith.mulf %64, %68 : vector<2x8x8xf32>
    %70 = arith.truncf %69 : vector<2x8x8xf32> to vector<2x8x8xbf16>
    "tpu.trace_start"() <{level = 10 : i32, message = "bij,bjd->bid"}> : () -> ()
    %cst_26 = arith.constant dense<0.000000e+00> : vector<2x8x8xf32>
    %71 = tpu.matmul %70, %58, %cst_26 {dimension_numbers = #tpu.dot_dimension_numbers<[2], [1], [1], [2], [0, 0, 0, 1, 1, 2], [0], [0]>} : vector<2x8x8xbf16>, vector<2x8x8xbf16>, vector<2x8x8xf32> -> vector<2x8x8xf32>
    "tpu.trace_stop"() : () -> ()
    %72 = vector.shape_cast %71 : vector<2x8x8xf32> to vector<16x8xf32>
    %73 = vector.extract_strided_slice %34 {offsets = [0, 0, 16], sizes = [2, 8, 8], strides = [1, 1, 1]} : vector<2x8x32xbf16> to vector<2x8x8xbf16>
    %74 = vector.extract_strided_slice %36 {offsets = [0, 0, 16], sizes = [2, 8, 8], strides = [1, 1, 1]} : vector<2x8x32xbf16> to vector<2x8x8xbf16>
    %75 = vector.extract_strided_slice %38 {offsets = [0, 0, 16], sizes = [2, 8, 8], strides = [1, 1, 1]} : vector<2x8x32xbf16> to vector<2x8x8xbf16>
    "tpu.trace_start"() <{level = 10 : i32, message = "bid,bjd->bij"}> : () -> ()
    %cst_27 = arith.constant dense<0.000000e+00> : vector<2x8x8xf32>
    %76 = tpu.matmul %73, %74, %cst_27 {dimension_numbers = #tpu.dot_dimension_numbers<[2], [2], [1], [1], [0, 0, 0, 1, 1, 1], [0], [0]>} : vector<2x8x8xbf16>, vector<2x8x8xbf16>, vector<2x8x8xf32> -> vector<2x8x8xf32>
    "tpu.trace_stop"() : () -> ()
    %cst_28 = arith.constant dense<0xFF800000> : vector<2x8xf32>
    %77 = vector.multi_reduction <maximumf>, %76, %cst_28 [2] : vector<2x8x8xf32> to vector<2x8xf32>
    %78 = vector.shape_cast %77 : vector<2x8xf32> to vector<2x8x1xf32>
    %79 = vector.broadcast %78 : vector<2x8x1xf32> to vector<2x8x8xf32>
    %80 = arith.subf %76, %79 : vector<2x8x8xf32>
    %81 = math.exp %80 : vector<2x8x8xf32>
    %cst_29 = arith.constant dense<0.000000e+00> : vector<2x8xf32>
    %82 = vector.multi_reduction <add>, %81, %cst_29 [2] : vector<2x8x8xf32> to vector<2x8xf32>
    %83 = vector.shape_cast %82 : vector<2x8xf32> to vector<2x8x1xf32>
    %84 = tpu.reciprocal %83 {approx = true} : vector<2x8x1xf32> -> vector<2x8x1xf32>
    %85 = vector.broadcast %84 : vector<2x8x1xf32> to vector<2x8x8xf32>
    %86 = arith.mulf %81, %85 : vector<2x8x8xf32>
    %87 = arith.truncf %86 : vector<2x8x8xf32> to vector<2x8x8xbf16>
    "tpu.trace_start"() <{level = 10 : i32, message = "bij,bjd->bid"}> : () -> ()
    %cst_30 = arith.constant dense<0.000000e+00> : vector<2x8x8xf32>
    %88 = tpu.matmul %87, %75, %cst_30 {dimension_numbers = #tpu.dot_dimension_numbers<[2], [1], [1], [2], [0, 0, 0, 1, 1, 2], [0], [0]>} : vector<2x8x8xbf16>, vector<2x8x8xbf16>, vector<2x8x8xf32> -> vector<2x8x8xf32>
    "tpu.trace_stop"() : () -> ()
    %89 = vector.shape_cast %88 : vector<2x8x8xf32> to vector<16x8xf32>
    %90 = vector.extract_strided_slice %34 {offsets = [0, 0, 24], sizes = [2, 8, 8], strides = [1, 1, 1]} : vector<2x8x32xbf16> to vector<2x8x8xbf16>
    %91 = vector.extract_strided_slice %36 {offsets = [0, 0, 24], sizes = [2, 8, 8], strides = [1, 1, 1]} : vector<2x8x32xbf16> to vector<2x8x8xbf16>
    %92 = vector.extract_strided_slice %38 {offsets = [0, 0, 24], sizes = [2, 8, 8], strides = [1, 1, 1]} : vector<2x8x32xbf16> to vector<2x8x8xbf16>
    "tpu.trace_start"() <{level = 10 : i32, message = "bid,bjd->bij"}> : () -> ()
    %cst_31 = arith.constant dense<0.000000e+00> : vector<2x8x8xf32>
    %93 = tpu.matmul %90, %91, %cst_31 {dimension_numbers = #tpu.dot_dimension_numbers<[2], [2], [1], [1], [0, 0, 0, 1, 1, 1], [0], [0]>} : vector<2x8x8xbf16>, vector<2x8x8xbf16>, vector<2x8x8xf32> -> vector<2x8x8xf32>
    "tpu.trace_stop"() : () -> ()
    %cst_32 = arith.constant dense<0xFF800000> : vector<2x8xf32>
    %94 = vector.multi_reduction <maximumf>, %93, %cst_32 [2] : vector<2x8x8xf32> to vector<2x8xf32>
    %95 = vector.shape_cast %94 : vector<2x8xf32> to vector<2x8x1xf32>
    %96 = vector.broadcast %95 : vector<2x8x1xf32> to vector<2x8x8xf32>
    %97 = arith.subf %93, %96 : vector<2x8x8xf32>
    %98 = math.exp %97 : vector<2x8x8xf32>
    %cst_33 = arith.constant dense<0.000000e+00> : vector<2x8xf32>
    %99 = vector.multi_reduction <add>, %98, %cst_33 [2] : vector<2x8x8xf32> to vector<2x8xf32>
    %100 = vector.shape_cast %99 : vector<2x8xf32> to vector<2x8x1xf32>
    %101 = tpu.reciprocal %100 {approx = true} : vector<2x8x1xf32> -> vector<2x8x1xf32>
    %102 = vector.broadcast %101 : vector<2x8x1xf32> to vector<2x8x8xf32>
    %103 = arith.mulf %98, %102 : vector<2x8x8xf32>
    %104 = arith.truncf %103 : vector<2x8x8xf32> to vector<2x8x8xbf16>
    "tpu.trace_start"() <{level = 10 : i32, message = "bij,bjd->bid"}> : () -> ()
    %cst_34 = arith.constant dense<0.000000e+00> : vector<2x8x8xf32>
    %105 = tpu.matmul %104, %92, %cst_34 {dimension_numbers = #tpu.dot_dimension_numbers<[2], [1], [1], [2], [0, 0, 0, 1, 1, 2], [0], [0]>} : vector<2x8x8xbf16>, vector<2x8x8xbf16>, vector<2x8x8xf32> -> vector<2x8x8xf32>
    "tpu.trace_stop"() : () -> ()
    %106 = vector.shape_cast %105 : vector<2x8x8xf32> to vector<16x8xf32>
    %107 = vector.shape_cast %52 : vector<2x8x8xf32> to vector<2x1x8x8xf32>
    %108 = vector.shape_cast %69 : vector<2x8x8xf32> to vector<2x1x8x8xf32>
    %109 = vector.shape_cast %86 : vector<2x8x8xf32> to vector<2x1x8x8xf32>
    %110 = vector.shape_cast %103 : vector<2x8x8xf32> to vector<2x1x8x8xf32>
    %111 = tpu.concatenate %107, %108, %109, %110 in 1 : vector<2x1x8x8xf32>, vector<2x1x8x8xf32>, vector<2x1x8x8xf32>, vector<2x1x8x8xf32> -> vector<2x4x8x8xf32>
    %c0_35 = arith.constant 0 : index
    %c0_36 = arith.constant 0 : index
    %c0_37 = arith.constant 0 : index
    %c0_38 = arith.constant 0 : index
    %112 = vector.load %arg14[%c0_35, %c0_36, %c0_37, %c0_38] : memref<2x4x8x8xf32, #tpu.memory_space<vmem>>, vector<2x4x8x8xf32>
    tpu.vector_store %arg14[%c0_35, %c0_36, %c0_37, %c0_38], %111 {strides = array<i32>} : memref<2x4x8x8xf32, #tpu.memory_space<vmem>>, vector<2x4x8x8xf32>,
    %113 = tpu.concatenate %55, %72, %89, %106 in 1 : vector<16x8xf32>, vector<16x8xf32>, vector<16x8xf32>, vector<16x8xf32> -> vector<16x32xf32>
    %114 = arith.truncf %113 : vector<16x32xf32> to vector<16x32xbf16>
    %c0_39 = arith.constant 0 : index
    %c0_40 = arith.constant 0 : index
    %115 = vector.load %arg7[%c0_39, %c0_40] : memref<32x32xbf16, #tpu.memory_space<vmem>>, vector<32x32xbf16>
    %cst_41 = arith.constant dense<0.000000e+00> : vector<16x32xf32>
    %116 = tpu.matmul %114, %115, %cst_41 {dimension_numbers = #tpu.dot_dimension_numbers<[1], [0], [0], [1], [0, 0, 1, 1], [], []>} : vector<16x32xbf16>, vector<32x32xbf16>, vector<16x32xf32> -> vector<16x32xf32>
    %117 = arith.addf %1, %116 : vector<16x32xf32>
    %c0_42 = arith.constant 0 : index
    %c0_43 = arith.constant 0 : index
    %118 = vector.load %arg8[%c0_42, %c0_43] : memref<1x32xf32, #tpu.memory_space<vmem>>, vector<1x32xf32>
    %119 = vector.broadcast %118 : vector<1x32xf32> to vector<16x32xf32>
    %120 = arith.addf %117, %119 : vector<16x32xf32>
    %cst_44 = arith.constant dense<0.000000e+00> : vector<16xf32>
    %121 = vector.multi_reduction <add>, %120, %cst_44 [1] : vector<16x32xf32> to vector<16xf32>
    %122 = vector.shape_cast %121 : vector<16xf32> to vector<16x1xf32>
    %cst_45 = arith.constant 3.200000e+01 : f32
    %123 = vector.broadcast %cst_45 : f32 to vector<16x1xf32>
    %124 = arith.divf %122, %123 : vector<16x1xf32>
    %125 = vector.broadcast %124 : vector<16x1xf32> to vector<16x32xf32>
    %126 = arith.subf %120, %125 : vector<16x32xf32>
    %127 = arith.mulf %126, %126 : vector<16x32xf32>
    %cst_46 = arith.constant dense<0.000000e+00> : vector<16xf32>
    %128 = vector.multi_reduction <add>, %127, %cst_46 [1] : vector<16x32xf32> to vector<16xf32>
    %129 = vector.shape_cast %128 : vector<16xf32> to vector<16x1xf32>
    %cst_47 = arith.constant 3.200000e+01 : f32
    %130 = vector.broadcast %cst_47 : f32 to vector<16x1xf32>
    %131 = arith.divf %129, %130 : vector<16x1xf32>
    %132 = vector.broadcast %124 : vector<16x1xf32> to vector<16x32xf32>
    %133 = arith.subf %120, %132 : vector<16x32xf32>
    %cst_48 = arith.constant 9.99999974E-6 : f32
    %134 = vector.broadcast %cst_48 : f32 to vector<16x1xf32>
    %135 = arith.addf %131, %134 : vector<16x1xf32>
    %136 = math.rsqrt %135 : vector<16x1xf32>
    %137 = vector.broadcast %136 : vector<16x1xf32> to vector<16x32xf32>
    %138 = arith.mulf %133, %137 : vector<16x32xf32>
    %139 = vector.broadcast %2 : vector<1x32xf32> to vector<16x32xf32>
    %140 = arith.mulf %138, %139 : vector<16x32xf32>
    %141 = vector.broadcast %3 : vector<1x32xf32> to vector<16x32xf32>
    %142 = arith.addf %140, %141 : vector<16x32xf32>
    %143 = arith.truncf %142 : vector<16x32xf32> to vector<16x32xbf16>
    %c0_49 = arith.constant 0 : index
    %c0_50 = arith.constant 0 : index
    %144 = vector.load %arg9[%c0_49, %c0_50] : memref<32x64xbf16, #tpu.memory_space<vmem>>, vector<32x64xbf16>
    %cst_51 = arith.constant dense<0.000000e+00> : vector<16x64xf32>
    %145 = tpu.matmul %143, %144, %cst_51 {dimension_numbers = #tpu.dot_dimension_numbers<[1], [0], [0], [1], [0, 0, 1, 1], [], []>} : vector<16x32xbf16>, vector<32x64xbf16>, vector<16x64xf32> -> vector<16x64xf32>
    %c0_52 = arith.constant 0 : index
    %c0_53 = arith.constant 0 : index
    %146 = vector.load %arg10[%c0_52, %c0_53] : memref<1x64xf32, #tpu.memory_space<vmem>>, vector<1x64xf32>
    %147 = vector.broadcast %146 : vector<1x64xf32> to vector<16x64xf32>
    %148 = arith.addf %145, %147 : vector<16x64xf32>
    %cst_54 = arith.constant 5.000000e-01 : f32
    %149 = vector.broadcast %cst_54 : f32 to vector<16x64xf32>
    %150 = arith.mulf %149, %148 : vector<16x64xf32>
    %cst_55 = arith.constant 0.707106769 : f32
    %151 = vector.broadcast %cst_55 : f32 to vector<16x64xf32>
    %152 = arith.mulf %148, %151 : vector<16x64xf32>
    %153 = math.erf %152 : vector<16x64xf32>
    %cst_56 = arith.constant 1.000000e+00 : f32
    %154 = vector.broadcast %cst_56 : f32 to vector<16x64xf32>
    %155 = arith.addf %154, %153 : vector<16x64xf32>
    %156 = arith.mulf %150, %155 : vector<16x64xf32>
    %157 = arith.truncf %156 : vector<16x64xf32> to vector<16x64xbf16>
    %c0_57 = arith.constant 0 : index
    %c0_58 = arith.constant 0 : index
    %158 = vector.load %arg11[%c0_57, %c0_58] : memref<64x32xbf16, #tpu.memory_space<vmem>>, vector<64x32xbf16>
    %cst_59 = arith.constant dense<0.000000e+00> : vector<16x32xf32>
    %159 = tpu.matmul %157, %158, %cst_59 {dimension_numbers = #tpu.dot_dimension_numbers<[1], [0], [0], [1], [0, 0, 1, 1], [], []>} : vector<16x64xbf16>, vector<64x32xbf16>, vector<16x32xf32> -> vector<16x32xf32>
    %c0_60 = arith.constant 0 : index
    %c0_61 = arith.constant 0 : index
    %160 = vector.load %arg12[%c0_60, %c0_61] : memref<1x32xf32, #tpu.memory_space<vmem>>, vector<1x32xf32>
    %161 = vector.broadcast %160 : vector<1x32xf32> to vector<16x32xf32>
    %162 = arith.addf %159, %161 : vector<16x32xf32>
    %163 = arith.addf %120, %162 : vector<16x32xf32>
    %164 = vector.shape_cast %163 : vector<16x32xf32> to vector<2x8x32xf32>
    %c0_62 = arith.constant 0 : index
    %c0_63 = arith.constant 0 : index
    %c0_64 = arith.constant 0 : index
    %165 = vector.load %arg13[%c0_62, %c0_63, %c0_64] : memref<2x8x32xf32, #tpu.memory_space<vmem>>, vector<2x8x32xf32>
    tpu.vector_store %arg13[%c0_62, %c0_63, %c0_64], %164 {strides = array<i32>} : memref<2x8x32xf32, #tpu.memory_space<vmem>>, vector<2x8x32xf32>,
    return
  }
  func.func @transform_0(%arg0: i32) -> (i32, i32, i32) {
    %c0_i32 = arith.constant 0 : i32
    %c0_i32_0 = arith.constant 0 : i32
    %c0_i32_1 = arith.constant 0 : i32
    return %arg0, %c0_i32, %c0_i32_0 : i32, i32, i32
  }
  func.func @transform_1(%arg0: i32) -> (i32, i32) {
    %c0_i32 = arith.constant 0 : i32
    %c0_i32_0 = arith.constant 0 : i32
    %c0_i32_1 = arith.constant 0 : i32
    return %c0_i32, %c0_i32_0 : i32, i32
  }
  func.func @transform_2(%arg0: i32) -> (i32, i32) {
    %c0_i32 = arith.constant 0 : i32
    %c0_i32_0 = arith.constant 0 : i32
    %c0_i32_1 = arith.constant 0 : i32
    return %c0_i32, %c0_i32_0 : i32, i32
  }
  func.func @transform_3(%arg0: i32) -> (i32, i32) {
    %c0_i32 = arith.constant 0 : i32
    %c0_i32_0 = arith.constant 0 : i32
    %c0_i32_1 = arith.constant 0 : i32
    return %c0_i32, %c0_i32_0 : i32, i32
  }
  func.func @transform_4(%arg0: i32) -> (i32, i32) {
    %c0_i32 = arith.constant 0 : i32
    %c0_i32_0 = arith.constant 0 : i32
    %c0_i32_1 = arith.constant 0 : i32
    return %c0_i32, %c0_i32_0 : i32, i32
  }
  func.func @transform_5(%arg0: i32) -> (i32, i32) {
    %c0_i32 = arith.constant 0 : i32
    %c0_i32_0 = arith.constant 0 : i32
    %c0_i32_1 = arith.constant 0 : i32
    return %c0_i32, %c0_i32_0 : i32, i32
  }
  func.func @transform_6(%arg0: i32) -> (i32, i32) {
    %c0_i32 = arith.constant 0 : i32
    %c0_i32_0 = arith.constant 0 : i32
    %c0_i32_1 = arith.constant 0 : i32
    return %c0_i32, %c0_i32_0 : i32, i32
  }
  func.func @transform_7(%arg0: i32) -> (i32, i32) {
    %c0_i32 = arith.constant 0 : i32
    %c0_i32_0 = arith.constant 0 : i32
    %c0_i32_1 = arith.constant 0 : i32
    return %c0_i32, %c0_i32_0 : i32, i32
  }
  func.func @transform_8(%arg0: i32) -> (i32, i32) {
    %c0_i32 = arith.constant 0 : i32
    %c0_i32_0 = arith.constant 0 : i32
    %c0_i32_1 = arith.constant 0 : i32
    return %c0_i32, %c0_i32_0 : i32, i32
  }
  func.func @transform_9(%arg0: i32) -> (i32, i32) {
    %c0_i32 = arith.constant 0 : i32
    %c0_i32_0 = arith.constant 0 : i32
    %c0_i32_1 = arith.constant 0 : i32
    return %c0_i32, %c0_i32_0 : i32, i32
  }
  func.func @transform_10(%arg0: i32) -> (i32, i32) {
    %c0_i32 = arith.constant 0 : i32
    %c0_i32_0 = arith.constant 0 : i32
    %c0_i32_1 = arith.constant 0 : i32
    return %c0_i32, %c0_i32_0 : i32, i32
  }
  func.func @transform_11(%arg0: i32) -> (i32, i32) {
    %c0_i32 = arith.constant 0 : i32
    %c0_i32_0 = arith.constant 0 : i32
    %c0_i32_1 = arith.constant 0 : i32
    return %c0_i32, %c0_i32_0 : i32, i32
  }
  func.func @transform_12(%arg0: i32) -> (i32, i32, i32) {
    %c0_i32 = arith.constant 0 : i32
    %c0_i32_0 = arith.constant 0 : i32
    %c0_i32_1 = arith.constant 0 : i32
    return %arg0, %c0_i32, %c0_i32_0 : i32, i32, i32
  }
  func.func @transform_13(%arg0: i32) -> (i32, i32, i32, i32) {
    %c0_i32 = arith.constant 0 : i32
    %c0_i32_0 = arith.constant 0 : i32
    %c0_i32_1 = arith.constant 0 : i32
    %c0_i32_2 = arith.constant 0 : i32
    return %arg0, %c0_i32, %c0_i32_0, %c0_i32_1 : i32, i32, i32, i32
  }
}

</mosaic_0001>

<llo_original>
// kernel: tpu_custom_call.1
$region0: #{tpu_custom_call.1}
  #allocation0 [shape = 'u32[]', space=smem, size = 0x4, offset = 0x4, fixed_abs, tag = 'smem constant byte address 0x4 - core index']
  #allocation1 [shape = 'u32[144,128]{1,0:T(1,128)}', space=vmem, size = 0x12000, scoped, tag = 'internal scratch']
  %s0 = inlined_call_operand.hbm [shape: f32[2,8,32], index: 0, kind: input, shape index: {}]
  %s1 = inlined_call_operand.hbm [shape: f32[1,32], index: 1, kind: input, shape index: {}]
  %s2 = inlined_call_operand.hbm [shape: f32[1,32], index: 2, kind: input, shape index: {}]
  %s3 = inlined_call_operand.hbm [shape: bf16[32,32], index: 3, kind: input, shape index: {}]
  %s4 = inlined_call_operand.hbm [shape: bf16[32,32], index: 4, kind: input, shape index: {}]
  %s5 = inlined_call_operand.hbm [shape: bf16[32,32], index: 5, kind: input, shape index: {}]
  %s6 = inlined_call_operand.hbm [shape: bf16[32,32], index: 6, kind: input, shape index: {}]
  %s7 = inlined_call_operand.hbm [shape: f32[1,32], index: 7, kind: input, shape index: {}]
  %s8 = inlined_call_operand.hbm [shape: bf16[32,64], index: 8, kind: input, shape index: {}]
  %s9 = inlined_call_operand.hbm [shape: f32[1,64], index: 9, kind: input, shape index: {}]
  %s10 = inlined_call_operand.hbm [shape: bf16[64,32], index: 10, kind: input, shape index: {}]
  %s11 = inlined_call_operand.hbm [shape: f32[1,32], index: 11, kind: input, shape index: {}]
  %s12 = inlined_call_operand.hbm [shape: f32[2,8,32], index: 12, kind: output, shape index: {0}]
  %s13 = inlined_call_operand.hbm [shape: f32[2,4,8,8], index: 13, kind: output, shape index: {1}]
  %14 = xla_tuple %s12, %s13
  %s15 = sld [smem:[#allocation0]]
  $region114: #{tpu_custom_call.1} parent=0
    _
  %s17 = ssub.s32 1, %s15
  %s18 = scalar_select 0, %s17, %s15
  $region1: #{tpu_custom_call.1} parent=0
    #allocation2 [shape = 'u8[8192]{0}', space=vmem, size = 0x2000, scoped, tag = 'input window, operand 0, single buffered']
    #allocation3 [shape = 's32[1]{0}', space=sflag, size = 0x4, scoped, tag = 'scoped memory for tpu_custom_call.1']
    #allocation4 [shape = 's32[1]{0}', space=sflag, size = 0x4, scoped, tag = 'scoped memory for tpu_custom_call.1']
    #allocation5 [shape = 'u8[512]{0}', space=vmem, size = 0x400, scoped, tag = 'input window, operand 1, single buffered']
    #allocation6 [shape = 's32[1]{0}', space=sflag, size = 0x4, scoped, tag = 'scoped memory for tpu_custom_call.1']
    #allocation7 [shape = 'u8[512]{0}', space=vmem, size = 0x400, scoped, tag = 'input window, operand 2, single buffered']
    #allocation8 [shape = 'u8[8192]{0}', space=vmem, size = 0x2000, scoped, tag = 'input window, operand 3, single buffered']
    #allocation9 [shape = 's32[1]{0}', space=sflag, size = 0x4, scoped, tag = 'scoped memory for tpu_custom_call.1']
    #allocation10 [shape = 'u8[8192]{0}', space=vmem, size = 0x2000, scoped, tag = 'input window, operand 4, single buffered']
    #allocation11 [shape = 'u8[8192]{0}', space=vmem, size = 0x2000, scoped, tag = 'input window, operand 5, single buffered']
    #allocation12 [shape = 's32[1]{0}', space=sflag, size = 0x4, scoped, tag = 'scoped memory for tpu_custom_call.1']
    #allocation13 [shape = 'u8[8192]{0}', space=vmem, size = 0x2000, scoped, tag = 'input window, operand 6, single buffered']
    #allocation14 [shape = 'u8[512]{0}', space=vmem, size = 0x400, scoped, tag = 'input window, operand 7, single buffered']
    #allocation15 [shape = 's32[1]{0}', space=sflag, size = 0x4, scoped, tag = 'scoped memory for tpu_custom_call.1']
    #allocation16 [shape = 'u8[8192]{0}', space=vmem, size = 0x2000, scoped, tag = 'input window, operand 8, single buffered']
    #allocation17 [shape = 'u8[512]{0}', space=vmem, size = 0x400, scoped, tag = 'input window, operand 9, single buffered']
    #allocation18 [shape = 's32[1]{0}', space=sflag, size = 0x4, scoped, tag = 'scoped memory for tpu_custom_call.1']
    #allocation19 [shape = 'u8[16384]{0}', space=vmem, size = 0x4000, scoped, tag = 'input window, operand 10, single buffered']
    #allocation20 [shape = 'u8[512]{0}', space=vmem, size = 0x400, scoped, tag = 'input window, operand 11, single buffered']
    #allocation21 [shape = 's32[1]{0}', space=sflag, size = 0x4, scoped, tag = 'scoped memory for tpu_custom_call.1']
    #allocation22 [shape = 'u8[8192]{0}', space=vmem, size = 0x2000, scoped, tag = 'output window, operand 0, single buffered']
    #allocation23 [shape = 'u8[32768]{0}', space=vmem, size = 0x8000, scoped, tag = 'output window, operand 1, single buffered']
    #allocation24 [shape = 's32[1]{0}', space=sflag, size = 0x4, scoped, tag = 'scoped memory for tpu_custom_call.1']
    %19 = vsyncpa [#allocation3], 0
    %20 = vsyncpa [#allocation6], 0
    %21 = vsyncpa [#allocation9], 0
    %22 = vsyncpa [#allocation12], 0
    %23 = vsyncpa [#allocation15], 0
    %24 = vsyncpa [#allocation18], 0
    %25 = vsyncpa [#allocation21], 0
    %26 = vsyncpa [#allocation4], 0
    %27 = vsyncpa [#allocation24], 0
    // Predicated region
    $region2: #{tpu_custom_call.1} parent=1 // pred_check
      _
    $region3: #{tpu_custom_call.1} parent=1 // pred_check_branch
      %29 = sbr.rel (0) target = $region5
    $region4: #{tpu_custom_call.1} parent=1 // pred_region
      %s31 = ssub.s32 256, 256
      %32 = vsyncadd [#allocation3], %s31
      %s33 = sshll.u32 [#allocation2], 4
      %s34 = int_to_ptr.vmem [resolvable:$true] %s33
      %39 = dma.hbm_to_vmem [thread:$0]  %s0, 256, %s34, [#allocation3], 128, 128, 8
    $region5: #{tpu_custom_call.1} parent=1 // pred_fallthru
      _
    // Predicated region
    $region6: #{tpu_custom_call.1} parent=1 // pred_check
      _
    $region7: #{tpu_custom_call.1} parent=1 // pred_check_branch
      %41 = sbr.rel (0) target = $region9
    $region8: #{tpu_custom_call.1} parent=1 // pred_region
      %s43 = ssub.s32 16, 16
      %44 = vsyncadd [#allocation6], %s43
      %s46 = sshll.u32 [#allocation5], 4
      %s47 = int_to_ptr.vmem [resolvable:$true] %s46
      %49 = dma.hbm_to_vmem [thread:$0]  %s1, 16, %s47, [#allocation6]
    $region9: #{tpu_custom_call.1} parent=1 // pred_fallthru
      _
    // Predicated region
    $region10: #{tpu_custom_call.1} parent=1 // pred_check
      _
    $region11: #{tpu_custom_call.1} parent=1 // pred_check_branch
      %51 = sbr.rel (0) target = $region13
    $region12: #{tpu_custom_call.1} parent=1 // pred_region
      %s53 = ssub.s32 16, 16
      %54 = vsyncadd [#allocation6], %s53
      %s56 = sshll.u32 [#allocation7], 4
      %s57 = int_to_ptr.vmem [resolvable:$true] %s56
      %59 = dma.hbm_to_vmem [thread:$0]  %s2, 16, %s57, [#allocation6]
    $region13: #{tpu_custom_call.1} parent=1 // pred_fallthru
      _
    // Predicated region
    $region14: #{tpu_custom_call.1} parent=1 // pred_check
      _
    $region15: #{tpu_custom_call.1} parent=1 // pred_check_branch
      %61 = sbr.rel (0) target = $region17
    $region16: #{tpu_custom_call.1} parent=1 // pred_region
      %s63 = ssub.s32 256, 256
      %64 = vsyncadd [#allocation9], %s63
      %s65 = sshll.u32 [#allocation8], 4
      %s66 = int_to_ptr.vmem [resolvable:$true] %s65
      %71 = dma.hbm_to_vmem [thread:$0]  %s3, 256, %s66, [#allocation9], 64, 64, 4
    $region17: #{tpu_custom_call.1} parent=1 // pred_fallthru
      _
    // Predicated region
    $region18: #{tpu_custom_call.1} parent=1 // pred_check
      _
    $region19: #{tpu_custom_call.1} parent=1 // pred_check_branch
      %73 = sbr.rel (0) target = $region21
    $region20: #{tpu_custom_call.1} parent=1 // pred_region
      %s75 = ssub.s32 256, 256
      %76 = vsyncadd [#allocation9], %s75
      %s77 = sshll.u32 [#allocation10], 4
      %s78 = int_to_ptr.vmem [resolvable:$true] %s77
      %83 = dma.hbm_to_vmem [thread:$0]  %s4, 256, %s78, [#allocation9], 64, 64, 4
    $region21: #{tpu_custom_call.1} parent=1 // pred_fallthru
      _
    // Predicated region
    $region22: #{tpu_custom_call.1} parent=1 // pred_check
      _
    $region23: #{tpu_custom_call.1} parent=1 // pred_check_branch
      %85 = sbr.rel (0) target = $region25
    $region24: #{tpu_custom_call.1} parent=1 // pred_region
      %s87 = ssub.s32 256, 256
      %88 = vsyncadd [#allocation12], %s87
      %s89 = sshll.u32 [#allocation11], 4
      %s90 = int_to_ptr.vmem [resolvable:$true] %s89
      %95 = dma.hbm_to_vmem [thread:$0]  %s5, 256, %s90, [#allocation12], 64, 64, 4
    $region25: #{tpu_custom_call.1} parent=1 // pred_fallthru
      _
    // Predicated region
    $region26: #{tpu_custom_call.1} parent=1 // pred_check
      _
    $region27: #{tpu_custom_call.1} parent=1 // pred_check_branch
      %97 = sbr.rel (0) target = $region29
    $region28: #{tpu_custom_call.1} parent=1 // pred_region
      %s99 = ssub.s32 256, 256
      %100 = vsyncadd [#allocation12], %s99
      %s101 = sshll.u32 [#allocation13], 4
      %s102 = int_to_ptr.vmem [resolvable:$true] %s101
      %107 = dma.hbm_to_vmem [thread:$0]  %s6, 256, %s102, [#allocation12], 64, 64, 4
    $region29: #{tpu_custom_call.1} parent=1 // pred_fallthru
      _
    // Predicated region
    $region30: #{tpu_custom_call.1} parent=1 // pred_check
      _
    $region31: #{tpu_custom_call.1} parent=1 // pred_check_branch
      %109 = sbr.rel (0) target = $region33
    $region32: #{tpu_custom_call.1} parent=1 // pred_region
      %s111 = ssub.s32 16, 16
      %112 = vsyncadd [#allocation15], %s111
      %s114 = sshll.u32 [#allocation14], 4
      %s115 = int_to_ptr.vmem [resolvable:$true] %s114
      %117 = dma.hbm_to_vmem [thread:$0]  %s7, 16, %s115, [#allocation15]
    $region33: #{tpu_custom_call.1} parent=1 // pred_fallthru
      _
    // Predicated region
    $region34: #{tpu_custom_call.1} parent=1 // pred_check
      _
    $region35: #{tpu_custom_call.1} parent=1 // pred_check_branch
      %119 = sbr.rel (0) target = $region37
    $region36: #{tpu_custom_call.1} parent=1 // pred_region
      %s121 = ssub.s32 256, 256
      %122 = vsyncadd [#allocation15], %s121
      %s123 = sshll.u32 [#allocation16], 4
      %s124 = int_to_ptr.vmem [resolvable:$true] %s123
      %129 = dma.hbm_to_vmem [thread:$0]  %s8, 256, %s124, [#allocation15], 64, 64, 4
    $region37: #{tpu_custom_call.1} parent=1 // pred_fallthru
      _
    // Predicated region
    $region38: #{tpu_custom_call.1} parent=1 // pred_check
      _
    $region39: #{tpu_custom_call.1} parent=1 // pred_check_branch
      %131 = sbr.rel (0) target = $region41
    $region40: #{tpu_custom_call.1} parent=1 // pred_region
      %s133 = ssub.s32 16, 16
      %134 = vsyncadd [#allocation18], %s133
      %s136 = sshll.u32 [#allocation17], 4
      %s137 = int_to_ptr.vmem [resolvable:$true] %s136
      %139 = dma.hbm_to_vmem [thread:$0]  %s9, 16, %s137, [#allocation18]
    $region41: #{tpu_custom_call.1} parent=1 // pred_fallthru
      _
    // Predicated region
    $region42: #{tpu_custom_call.1} parent=1 // pred_check
      _
    $region43: #{tpu_custom_call.1} parent=1 // pred_check_branch
      %141 = sbr.rel (0) target = $region45
    $region44: #{tpu_custom_call.1} parent=1 // pred_region
      %s143 = ssub.s32 512, 512
      %144 = vsyncadd [#allocation18], %s143
      %s145 = sshll.u32 [#allocation19], 4
      %s146 = int_to_ptr.vmem [resolvable:$true] %s145
      %151 = dma.hbm_to_vmem [thread:$0]  %s10, 512, %s146, [#allocation18], 64, 64, 4
    $region45: #{tpu_custom_call.1} parent=1 // pred_fallthru
      _
    // Predicated region
    $region46: #{tpu_custom_call.1} parent=1 // pred_check
      _
    $region47: #{tpu_custom_call.1} parent=1 // pred_check_branch
      %153 = sbr.rel (0) target = $region49
    $region48: #{tpu_custom_call.1} parent=1 // pred_region
      %s155 = ssub.s32 16, 16
      %156 = vsyncadd [#allocation21], %s155
      %s158 = sshll.u32 [#allocation20], 4
      %s159 = int_to_ptr.vmem [resolvable:$true] %s158
      %161 = dma.hbm_to_vmem [thread:$0]  %s11, 16, %s159, [#allocation21]
    $region49: #{tpu_custom_call.1} parent=1 // pred_fallthru
      _
    // Predicated region
    $region50: #{tpu_custom_call.1} parent=1 // pred_check
      _
    $region51: #{tpu_custom_call.1} parent=1 // pred_check_branch
      %163 = sbr.rel (0) target = $region53
    $region52: #{tpu_custom_call.1} parent=1 // pred_region
      %164 = dma.done [#allocation3], 256
    $region53: #{tpu_custom_call.1} parent=1 // pred_fallthru
      _
    // Predicated region
    $region54: #{tpu_custom_call.1} parent=1 // pred_check
      _
    $region55: #{tpu_custom_call.1} parent=1 // pred_check_branch
      %166 = sbr.rel (0) target = $region57
    $region56: #{tpu_custom_call.1} parent=1 // pred_region
      %167 = dma.done [#allocation6], 16
    $region57: #{tpu_custom_call.1} parent=1 // pred_fallthru
      _
    // Predicated region
    $region58: #{tpu_custom_call.1} parent=1 // pred_check
      _
    $region59: #{tpu_custom_call.1} parent=1 // pred_check_branch
      %169 = sbr.rel (0) target = $region61
    $region60: #{tpu_custom_call.1} parent=1 // pred_region
      %170 = dma.done [#allocation6], 16
    $region61: #{tpu_custom_call.1} parent=1 // pred_fallthru
      _
    // Predicated region
    $region62: #{tpu_custom_call.1} parent=1 // pred_check
      _
    $region63: #{tpu_custom_call.1} parent=1 // pred_check_branch
      %172 = sbr.rel (0) target = $region65
    $region64: #{tpu_custom_call.1} parent=1 // pred_region
      %173 = dma.done [#allocation9], 256
    $region65: #{tpu_custom_call.1} parent=1 // pred_fallthru
      _
    // Predicated region
    $region66: #{tpu_custom_call.1} parent=1 // pred_check
      _
    $region67: #{tpu_custom_call.1} parent=1 // pred_check_branch
      %175 = sbr.rel (0) target = $region69
    $region68: #{tpu_custom_call.1} parent=1 // pred_region
      %176 = dma.done [#allocation9], 256
    $region69: #{tpu_custom_call.1} parent=1 // pred_fallthru
      _
    // Predicated region
    $region70: #{tpu_custom_call.1} parent=1 // pred_check
      _
    $region71: #{tpu_custom_call.1} parent=1 // pred_check_branch
      %178 = sbr.rel (0) target = $region73
    $region72: #{tpu_custom_call.1} parent=1 // pred_region
      %179 = dma.done [#allocation12], 256
    $region73: #{tpu_custom_call.1} parent=1 // pred_fallthru
      _
    // Predicated region
    $region74: #{tpu_custom_call.1} parent=1 // pred_check
      _
    $region75: #{tpu_custom_call.1} parent=1 // pred_check_branch
      %181 = sbr.rel (0) target = $region77
    $region76: #{tpu_custom_call.1} parent=1 // pred_region
      %182 = dma.done [#allocation12], 256
    $region77: #{tpu_custom_call.1} parent=1 // pred_fallthru
      _
    // Predicated region
    $region78: #{tpu_custom_call.1} parent=1 // pred_check
      _
    $region79: #{tpu_custom_call.1} parent=1 // pred_check_branch
      %184 = sbr.rel (0) target = $region81
    $region80: #{tpu_custom_call.1} parent=1 // pred_region
      %185 = dma.done [#allocation15], 16
    $region81: #{tpu_custom_call.1} parent=1 // pred_fallthru
      _
    // Predicated region
    $region82: #{tpu_custom_call.1} parent=1 // pred_check
      _
    $region83: #{tpu_custom_call.1} parent=1 // pred_check_branch
      %187 = sbr.rel (0) target = $region85
    $region84: #{tpu_custom_call.1} parent=1 // pred_region
      %188 = dma.done [#allocation15], 256
    $region85: #{tpu_custom_call.1} parent=1 // pred_fallthru
      _
    // Predicated region
    $region86: #{tpu_custom_call.1} parent=1 // pred_check
      _
    $region87: #{tpu_custom_call.1} parent=1 // pred_check_branch
      %190 = sbr.rel (0) target = $region89
    $region88: #{tpu_custom_call.1} parent=1 // pred_region
      %191 = dma.done [#allocation18], 16
    $region89: #{tpu_custom_call.1} parent=1 // pred_fallthru
      _
    // Predicated region
    $region90: #{tpu_custom_call.1} parent=1 // pred_check
      _
    $region91: #{tpu_custom_call.1} parent=1 // pred_check_branch
      %193 = sbr.rel (0) target = $region93
    $region92: #{tpu_custom_call.1} parent=1 // pred_region
      %194 = dma.done [#allocation18], 512
    $region93: #{tpu_custom_call.1} parent=1 // pred_fallthru
      _
    // Predicated region
    $region94: #{tpu_custom_call.1} parent=1 // pred_check
      _
    $region95: #{tpu_custom_call.1} parent=1 // pred_check_branch
      %196 = sbr.rel (0) target = $region97
    $region96: #{tpu_custom_call.1} parent=1 // pred_region
      %197 = dma.done [#allocation21], 16
    $region97: #{tpu_custom_call.1} parent=1 // pred_fallthru
      _
    %v199 = vld [vmem:[#allocation2] sm:$0xff]
    %v200 = vld [vmem:[#allocation2 + $0x8] sm:$0xff]
    %v201 = vld [vmem:[#allocation5] sm:$0x1]
    %v202 = vld [vmem:[#allocation7] sm:$0x1]
    %vm203 = vcmask 261120
    %v204 = vsel %vm203, %v199, 0.0
    %205 = vadd.xlane.f32.xlu0 %v204
    %v206 = vpop.xlane.xlu0 %205
    %v207 = vsel %vm203, %v200, 0.0
    %208 = vadd.xlane.f32.xlu0 %v207
    %v209 = vpop.xlane.xlu0 %208
    %v210 = vrcp.pop 32.0
    %v211 = vmul.f32 %v206, %v210
    %v212 = vmul.f32 %v209, %v210
    %v213 = vsub.f32 %v199, %v211
    %v214 = vsub.f32 %v200, %v212
    %v215 = vmul.f32 %v213, %v213
    %v216 = vmul.f32 %v214, %v214
    %v217 = vsel %vm203, %v215, 0.0
    %218 = vadd.xlane.f32.xlu0 %v217
    %v219 = vpop.xlane.xlu0 %218
    %v220 = vsel %vm203, %v216, 0.0
    %221 = vadd.xlane.f32.xlu0 %v220
    %v222 = vpop.xlane.xlu0 %221
    %v223 = vmul.f32 %v219, %v210
    %v224 = vmul.f32 %v222, %v210
    %v225 = vadd.f32 %v223, 1e-05
    %v226 = vadd.f32 %v224, 1e-05
    %v227 = vrsqrt.pop %v225
    %v228 = vrsqrt.pop %v226
    %v229 = vmul.f32 %v213, %v227
    %v230 = vmul.f32 %v214, %v228
    %v232 = vlaneseq
    %v233 = vshrl.u32 %v232, 7
    %v234 = vsub.s32 0, %v233
    %v235 = vrot.slane %v201, %v234
    %v237 = vmul.f32 %v229, %v235
    %v238 = vmul.f32 %v230, %v235
    %v240 = vlaneseq
    %v241 = vshrl.u32 %v240, 7
    %v242 = vsub.s32 0, %v241
    %v243 = vrot.slane %v202, %v242
    %v245 = vadd.f32 %v237, %v243
    %v246 = vadd.f32 %v238, %v243
    %v247 = vpack.c.bf16 %v246, %v245
    %v248 = vld [vmem:[#allocation8] sm:$0xf]
    %v249 = vld [vmem:[#allocation8 + $0x4] sm:$0xf]
    %v250 = vld [vmem:[#allocation8 + $0x8] sm:$0xf]
    %v251 = vld [vmem:[#allocation8 + $0xc] sm:$0xf]
    %v256 = vunpack.c.l.b16 %v248
    %v257 = vunpack.c.l.b16 %v249
    %v258 = vunpack.c.l.b16 %v250
    %v259 = vunpack.c.l.b16 %v251
    %v260 = vpack.c.b16 %v257, %v256
    %v261 = vpack.c.b16 %v259, %v258
    %v265 = vsel %vm203, %v247, 0
    %267 = vmatprep.subr.bf16.mxu0 0
    %268 = vmatpush1.bf16.msra.mxu0 %v260
    %269 = vmatprep.subr.bf16.mxu0 0
    %270 = vmatpush1.bf16.msra.mxu0 %v261
    %271 = vmatprep.subr.bf16.mxu0 0
    %272 = vmatpush1.bf16.msra.mxu0 0
    %273 = vmatprep.subr.bf16.mxu0 0
    %274 = vmatpush1.bf16.msra.mxu0 0
    %275 = vmatprep.subr.bf16.mxu0 0
    %276 = vmatpush1.bf16.msra.mxu0 0
    %277 = vmatprep.subr.bf16.mxu0 0
    %278 = vmatpush1.bf16.msra.mxu0 0
    %279 = vmatprep.subr.bf16.mxu0 0
    %280 = vmatpush1.bf16.msra.mxu0 0
    %281 = vmatprep.subr.bf16.mxu0 0
    %282 = vmatpush1.bf16.msra.mxu0 0
    %283 = vmatprep.subr.bf16.mxu0 0
    %284 = vmatpush1.bf16.msra.mxu0 0
    %285 = vmatprep.subr.bf16.mxu0 0
    %286 = vmatpush1.bf16.msra.mxu0 0
    %287 = vmatprep.subr.bf16.mxu0 0
    %288 = vmatpush1.bf16.msra.mxu0 0
    %289 = vmatprep.subr.bf16.mxu0 0
    %290 = vmatpush1.bf16.msra.mxu0 0
    %291 = vmatprep.subr.bf16.mxu0 0
    %292 = vmatpush1.bf16.msra.mxu0 0
    %293 = vmatprep.subr.bf16.mxu0 0
    %294 = vmatpush1.bf16.msra.mxu0 0
    %295 = vmatprep.subr.bf16.mxu0 0
    %296 = vmatpush1.bf16.msra.mxu0 0
    %297 = vmatprep.subr.bf16.mxu0 0
    %298 = vmatpush1.bf16.msra.mxu0 0
    %299 = vmatprep.mubr.bf16.mxu0 0
    %300 = vmatmul.mubr.bf16.gmra.mrb[0].mxu0 %v265
    %v301 = vpop.f32.mrb[0].mxu0
    %v302 = vadd.f32 0.0, %v301
    %v303 = vpop.f32.mrb[0].mxu0
    %v304 = vpop.f32.mrb[0].mxu0
    %v305 = vadd.f32 0.0, %v304
    %v306 = vpop.f32.mrb[0].mxu0
    %307 = vdwg.mxu0
    %v308 = vld [vmem:[#allocation10] sm:$0xf]
    %v309 = vld [vmem:[#allocation10 + $0x4] sm:$0xf]
    %v310 = vld [vmem:[#allocation10 + $0x8] sm:$0xf]
    %v311 = vld [vmem:[#allocation10 + $0xc] sm:$0xf]
    %v316 = vunpack.c.l.b16 %v308
    %v317 = vunpack.c.l.b16 %v309
    %v318 = vunpack.c.l.b16 %v310
    %v319 = vunpack.c.l.b16 %v311
    %v320 = vpack.c.b16 %v317, %v316
    %v321 = vpack.c.b16 %v319, %v318
    %324 = vmatprep.subr.bf16.mxu0 0
    %325 = vmatpush1.bf16.msra.mxu0 %v320
    %326 = vmatprep.subr.bf16.mxu0 0
    %327 = vmatpush1.bf16.msra.mxu0 %v321
    %328 = vmatprep.subr.bf16.mxu0 0
    %329 = vmatpush1.bf16.msra.mxu0 0
    %330 = vmatprep.subr.bf16.mxu0 0
    %331 = vmatpush1.bf16.msra.mxu0 0
    %332 = vmatprep.subr.bf16.mxu0 0
    %333 = vmatpush1.bf16.msra.mxu0 0
    %334 = vmatprep.subr.bf16.mxu0 0
    %335 = vmatpush1.bf16.msra.mxu0 0
    %336 = vmatprep.subr.bf16.mxu0 0
    %337 = vmatpush1.bf16.msra.mxu0 0
    %338 = vmatprep.subr.bf16.mxu0 0
    %339 = vmatpush1.bf16.msra.mxu0 0
    %340 = vmatprep.subr.bf16.mxu0 0
    %341 = vmatpush1.bf16.msra.mxu0 0
    %342 = vmatprep.subr.bf16.mxu0 0
    %343 = vmatpush1.bf16.msra.mxu0 0
    %344 = vmatprep.subr.bf16.mxu0 0
    %345 = vmatpush1.bf16.msra.mxu0 0
    %346 = vmatprep.subr.bf16.mxu0 0
    %347 = vmatpush1.bf16.msra.mxu0 0
    %348 = vmatprep.subr.bf16.mxu0 0
    %349 = vmatpush1.bf16.msra.mxu0 0
    %350 = vmatprep.subr.bf16.mxu0 0
    %351 = vmatpush1.bf16.msra.mxu0 0
    %352 = vmatprep.subr.bf16.mxu0 0
    %353 = vmatpush1.bf16.msra.mxu0 0
    %354 = vmatprep.subr.bf16.mxu0 0
    %355 = vmatpush1.bf16.msra.mxu0 0
    %356 = vmatprep.mubr.bf16.mxu0 0
    %357 = vmatmul.mubr.bf16.gmra.mrb[0].mxu0 %v265
    %v358 = vpop.f32.mrb[0].mxu0
    %v359 = vadd.f32 0.0, %v358
    %v360 = vpop.f32.mrb[0].mxu0
    %v361 = vpop.f32.mrb[0].mxu0
    %v362 = vadd.f32 0.0, %v361
    %v363 = vpop.f32.mrb[0].mxu0
    %364 = vdwg.mxu0
    %v365 = vld [vmem:[#allocation11] sm:$0xf]
    %v366 = vld [vmem:[#allocation11 + $0x4] sm:$0xf]
    %v367 = vld [vmem:[#allocation11 + $0x8] sm:$0xf]
    %v368 = vld [vmem:[#allocation11 + $0xc] sm:$0xf]
    %v373 = vunpack.c.l.b16 %v365
    %v374 = vunpack.c.l.b16 %v366
    %v375 = vunpack.c.l.b16 %v367
    %v376 = vunpack.c.l.b16 %v368
    %v377 = vpack.c.b16 %v374, %v373
    %v378 = vpack.c.b16 %v376, %v375
    %381 = vmatprep.subr.bf16.mxu0 0
    %382 = vmatpush1.bf16.msra.mxu0 %v377
    %383 = vmatprep.subr.bf16.mxu0 0
    %384 = vmatpush1.bf16.msra.mxu0 %v378
    %385 = vmatprep.subr.bf16.mxu0 0
    %386 = vmatpush1.bf16.msra.mxu0 0
    %387 = vmatprep.subr.bf16.mxu0 0
    %388 = vmatpush1.bf16.msra.mxu0 0
    %389 = vmatprep.subr.bf16.mxu0 0
    %390 = vmatpush1.bf16.msra.mxu0 0
    %391 = vmatprep.subr.bf16.mxu0 0
    %392 = vmatpush1.bf16.msra.mxu0 0
    %393 = vmatprep.subr.bf16.mxu0 0
    %394 = vmatpush1.bf16.msra.mxu0 0
    %395 = vmatprep.subr.bf16.mxu0 0
    %396 = vmatpush1.bf16.msra.mxu0 0
    %397 = vmatprep.subr.bf16.mxu0 0
    %398 = vmatpush1.bf16.msra.mxu0 0
    %399 = vmatprep.subr.bf16.mxu0 0
    %400 = vmatpush1.bf16.msra.mxu0 0
    %401 = vmatprep.subr.bf16.mxu0 0
    %402 = vmatpush1.bf16.msra.mxu0 0
    %403 = vmatprep.subr.bf16.mxu0 0
    %404 = vmatpush1.bf16.msra.mxu0 0
    %405 = vmatprep.subr.bf16.mxu0 0
    %406 = vmatpush1.bf16.msra.mxu0 0
    %407 = vmatprep.subr.bf16.mxu0 0
    %408 = vmatpush1.bf16.msra.mxu0 0
    %409 = vmatprep.subr.bf16.mxu0 0
    %410 = vmatpush1.bf16.msra.mxu0 0
    %411 = vmatprep.subr.bf16.mxu0 0
    %412 = vmatpush1.bf16.msra.mxu0 0
    %413 = vmatprep.mubr.bf16.mxu0 0
    %414 = vmatmul.mubr.bf16.gmra.mrb[0].mxu0 %v265
    %v415 = vpop.f32.mrb[0].mxu0
    %v416 = vadd.f32 0.0, %v415
    %v417 = vpop.f32.mrb[0].mxu0
    %v418 = vpop.f32.mrb[0].mxu0
    %v419 = vadd.f32 0.0, %v418
    %v420 = vpop.f32.mrb[0].mxu0
    %421 = vdwg.mxu0
    %v422 = vpack.c.bf16 %v302, %v302
    %v423 = vpack.c.bf16 %v305, %v305
    %v424 = vpack.c.bf16 %v359, %v359
    %v425 = vpack.c.bf16 %v362, %v362
    %v426 = vpack.c.bf16 %v416, %v416
    %v427 = vpack.c.bf16 %v419, %v419
    %vm428 = vcmask 64512
    %v430 = vsel %vm428, %v422, 0
    %v433 = vsel %vm428, %v424, 0
    %435 = vmatprep.subr.bf16.mxu0 0
    %436 = vmatpush1.bf16.xpose.msra.mxu0 %v433
    %437 = vmatprep.subr.bf16.mxu0 0
    %438 = vmatpush1.bf16.xpose.msra.mxu0 0
    %439 = vmatprep.subr.bf16.mxu0 0
    %440 = vmatpush1.bf16.xpose.msra.mxu0 0
    %441 = vmatprep.subr.bf16.mxu0 0
    %442 = vmatpush1.bf16.xpose.msra.mxu0 0
    %443 = vmatprep.subr.bf16.mxu0 0
    %444 = vmatpush1.bf16.xpose.msra.mxu0 0
    %445 = vmatprep.subr.bf16.mxu0 0
    %446 = vmatpush1.bf16.xpose.msra.mxu0 0
    %447 = vmatprep.subr.bf16.mxu0 0
    %448 = vmatpush1.bf16.xpose.msra.mxu0 0
    %449 = vmatprep.subr.bf16.mxu0 0
    %450 = vmatpush1.bf16.xpose.msra.mxu0 0
    %451 = vmatprep.subr.bf16.mxu0 0
    %452 = vmatpush1.bf16.xpose.msra.mxu0 0
    %453 = vmatprep.subr.bf16.mxu0 0
    %454 = vmatpush1.bf16.xpose.msra.mxu0 0
    %455 = vmatprep.subr.bf16.mxu0 0
    %456 = vmatpush1.bf16.xpose.msra.mxu0 0
    %457 = vmatprep.subr.bf16.mxu0 0
    %458 = vmatpush1.bf16.xpose.msra.mxu0 0
    %459 = vmatprep.subr.bf16.mxu0 0
    %460 = vmatpush1.bf16.xpose.msra.mxu0 0
    %461 = vmatprep.subr.bf16.mxu0 0
    %462 = vmatpush1.bf16.xpose.msra.mxu0 0
    %463 = vmatprep.subr.bf16.mxu0 0
    %464 = vmatpush1.bf16.xpose.msra.mxu0 0
    %465 = vmatprep.subr.bf16.mxu0 0
    %466 = vmatpush1.bf16.xpose.msra.mxu0 0
    %467 = vmatprep.mubr.bf16.mxu0 0
    %468 = vmatmul.mubr.bf16.gmra.mrb[0].mxu0 %v430
    %v469 = vpop.f32.mrb[0].mxu0
    %v470 = vadd.f32 0.0, %v469
    %v471 = vpop.f32.mrb[0].mxu0
    %v472 = vpop.f32.mrb[0].mxu0
    %v473 = vpop.f32.mrb[0].mxu0
    %474 = vdwg.mxu0
    %v476 = vsel %vm428, %v423, 0
    %v479 = vsel %vm428, %v425, 0
    %481 = vmatprep.subr.bf16.mxu0 0
    %482 = vmatpush1.bf16.xpose.msra.mxu0 %v479
    %483 = vmatprep.subr.bf16.mxu0 0
    %484 = vmatpush1.bf16.xpose.msra.mxu0 0
    %485 = vmatprep.subr.bf16.mxu0 0
    %486 = vmatpush1.bf16.xpose.msra.mxu0 0
    %487 = vmatprep.subr.bf16.mxu0 0
    %488 = vmatpush1.bf16.xpose.msra.mxu0 0
    %489 = vmatprep.subr.bf16.mxu0 0
    %490 = vmatpush1.bf16.xpose.msra.mxu0 0
    %491 = vmatprep.subr.bf16.mxu0 0
    %492 = vmatpush1.bf16.xpose.msra.mxu0 0
    %493 = vmatprep.subr.bf16.mxu0 0
    %494 = vmatpush1.bf16.xpose.msra.mxu0 0
    %495 = vmatprep.subr.bf16.mxu0 0
    %496 = vmatpush1.bf16.xpose.msra.mxu0 0
    %497 = vmatprep.subr.bf16.mxu0 0
    %498 = vmatpush1.bf16.xpose.msra.mxu0 0
    %499 = vmatprep.subr.bf16.mxu0 0
    %500 = vmatpush1.bf16.xpose.msra.mxu0 0
    %501 = vmatprep.subr.bf16.mxu0 0
    %502 = vmatpush1.bf16.xpose.msra.mxu0 0
    %503 = vmatprep.subr.bf16.mxu0 0
    %504 = vmatpush1.bf16.xpose.msra.mxu0 0
    %505 = vmatprep.subr.bf16.mxu0 0
    %506 = vmatpush1.bf16.xpose.msra.mxu0 0
    %507 = vmatprep.subr.bf16.mxu0 0
    %508 = vmatpush1.bf16.xpose.msra.mxu0 0
    %509 = vmatprep.subr.bf16.mxu0 0
    %510 = vmatpush1.bf16.xpose.msra.mxu0 0
    %511 = vmatprep.subr.bf16.mxu0 0
    %512 = vmatpush1.bf16.xpose.msra.mxu0 0
    %513 = vmatprep.mubr.bf16.mxu0 0
    %514 = vmatmul.mubr.bf16.gmra.mrb[0].mxu0 %v476
    %v515 = vpop.f32.mrb[0].mxu0
    %v516 = vadd.f32 0.0, %v515
    %v517 = vpop.f32.mrb[0].mxu0
    %v518 = vpop.f32.mrb[0].mxu0
    %v519 = vpop.f32.mrb[0].mxu0
    %520 = vdwg.mxu0
    %v521 = vsel %vm428, %v470, -inf
    %522 = vmax.xlane.f32.xlu0 %v521
    %v523 = vpop.xlane.xlu0 %522
    %v524 = vsel %vm428, %v516, -inf
    %525 = vmax.xlane.f32.xlu0 %v524
    %v526 = vpop.xlane.xlu0 %525
    %v527 = vsub.f32 %v470, %v523
    %v528 = vsub.f32 %v516, %v526
    %v529 = vmul.f32 %v527, 1.442695
    %v530 = vpow.pop %v529
    %v531 = vmul.f32 %v528, 1.442695
    %v532 = vpow.pop %v531
    %v533 = vsel %vm428, %v530, 0.0
    %534 = vadd.xlane.f32.xlu0 %v533
    %v535 = vpop.xlane.xlu0 %534
    %v536 = vsel %vm428, %v532, 0.0
    %537 = vadd.xlane.f32.xlu0 %v536
    %v538 = vpop.xlane.xlu0 %537
    %v539 = vrcp.pop %v535
    %v540 = vrcp.pop %v538
    %v541 = vmul.f32 %v530, %v539
    %v542 = vmul.f32 %v532, %v540
    %v543 = vpack.c.bf16 %v541, %v541
    %v544 = vpack.c.bf16 %v542, %v542
    %v546 = vsel %vm428, %v543, 0
    %vm548 = vcmask 1043456
    %v550 = vsel %vm548, %v426, 0
    %552 = vmatprep.subr.bf16.mxu0 0
    %553 = vmatpush1.bf16.msra.mxu0 %v550
    %554 = vmatprep.subr.bf16.mxu0 0
    %555 = vmatpush1.bf16.msra.mxu0 0
    %556 = vmatprep.subr.bf16.mxu0 0
    %557 = vmatpush1.bf16.msra.mxu0 0
    %558 = vmatprep.subr.bf16.mxu0 0
    %559 = vmatpush1.bf16.msra.mxu0 0
    %560 = vmatprep.subr.bf16.mxu0 0
    %561 = vmatpush1.bf16.msra.mxu0 0
    %562 = vmatprep.subr.bf16.mxu0 0
    %563 = vmatpush1.bf16.msra.mxu0 0
    %564 = vmatprep.subr.bf16.mxu0 0
    %565 = vmatpush1.bf16.msra.mxu0 0
    %566 = vmatprep.subr.bf16.mxu0 0
    %567 = vmatpush1.bf16.msra.mxu0 0
    %568 = vmatprep.subr.bf16.mxu0 0
    %569 = vmatpush1.bf16.msra.mxu0 0
    %570 = vmatprep.subr.bf16.mxu0 0
    %571 = vmatpush1.bf16.msra.mxu0 0
    %572 = vmatprep.subr.bf16.mxu0 0
    %573 = vmatpush1.bf16.msra.mxu0 0
    %574 = vmatprep.subr.bf16.mxu0 0
    %575 = vmatpush1.bf16.msra.mxu0 0
    %576 = vmatprep.subr.bf16.mxu0 0
    %577 = vmatpush1.bf16.msra.mxu0 0
    %578 = vmatprep.subr.bf16.mxu0 0
    %579 = vmatpush1.bf16.msra.mxu0 0
    %580 = vmatprep.subr.bf16.mxu0 0
    %581 = vmatpush1.bf16.msra.mxu0 0
    %582 = vmatprep.subr.bf16.mxu0 0
    %583 = vmatpush1.bf16.msra.mxu0 0
    %584 = vmatprep.mubr.bf16.mxu0 0
    %585 = vmatmul.mubr.bf16.gmra.mrb[0].mxu0 %v546
    %v586 = vpop.f32.mrb[0].mxu0
    %v587 = vadd.f32 0.0, %v586
    %v588 = vpop.f32.mrb[0].mxu0
    %v589 = vpop.f32.mrb[0].mxu0
    %v590 = vpop.f32.mrb[0].mxu0
    %591 = vdwg.mxu0
    %v593 = vsel %vm428, %v544, 0
    %v596 = vsel %vm548, %v427, 0
    %598 = vmatprep.subr.bf16.mxu0 0
    %599 = vmatpush1.bf16.msra.mxu0 %v596
    %600 = vmatprep.subr.bf16.mxu0 0
    %601 = vmatpush1.bf16.msra.mxu0 0
    %602 = vmatprep.subr.bf16.mxu0 0
    %603 = vmatpush1.bf16.msra.mxu0 0
    %604 = vmatprep.subr.bf16.mxu0 0
    %605 = vmatpush1.bf16.msra.mxu0 0
    %606 = vmatprep.subr.bf16.mxu0 0
    %607 = vmatpush1.bf16.msra.mxu0 0
    %608 = vmatprep.subr.bf16.mxu0 0
    %609 = vmatpush1.bf16.msra.mxu0 0
    %610 = vmatprep.subr.bf16.mxu0 0
    %611 = vmatpush1.bf16.msra.mxu0 0
    %612 = vmatprep.subr.bf16.mxu0 0
    %613 = vmatpush1.bf16.msra.mxu0 0
    %614 = vmatprep.subr.bf16.mxu0 0
    %615 = vmatpush1.bf16.msra.mxu0 0
    %616 = vmatprep.subr.bf16.mxu0 0
    %617 = vmatpush1.bf16.msra.mxu0 0
    %618 = vmatprep.subr.bf16.mxu0 0
    %619 = vmatpush1.bf16.msra.mxu0 0
    %620 = vmatprep.subr.bf16.mxu0 0
    %621 = vmatpush1.bf16.msra.mxu0 0
    %622 = vmatprep.subr.bf16.mxu0 0
    %623 = vmatpush1.bf16.msra.mxu0 0
    %624 = vmatprep.subr.bf16.mxu0 0
    %625 = vmatpush1.bf16.msra.mxu0 0
    %626 = vmatprep.subr.bf16.mxu0 0
    %627 = vmatpush1.bf16.msra.mxu0 0
    %628 = vmatprep.subr.bf16.mxu0 0
    %629 = vmatpush1.bf16.msra.mxu0 0
    %630 = vmatprep.mubr.bf16.mxu0 0
    %631 = vmatmul.mubr.bf16.gmra.mrb[0].mxu0 %v593
    %v632 = vpop.f32.mrb[0].mxu0
    %v633 = vadd.f32 0.0, %v632
    %v634 = vpop.f32.mrb[0].mxu0
    %v635 = vpop.f32.mrb[0].mxu0
    %v636 = vpop.f32.mrb[0].mxu0
    %637 = vdwg.mxu0
    %639 = vrot.lane.b32.xlu0 %v422, 120
    %v640 = vpop.permute.xlu0 %639
    %642 = vrot.lane.b32.xlu0 %v424, 120
    %v643 = vpop.permute.xlu0 %642
    %v645 = vsel %vm428, %v640, 0
    %v648 = vsel %vm428, %v643, 0
    %650 = vmatprep.subr.bf16.mxu0 0
    %651 = vmatpush1.bf16.xpose.msra.mxu0 %v648
    %652 = vmatprep.subr.bf16.mxu0 0
    %653 = vmatpush1.bf16.xpose.msra.mxu0 0
    %654 = vmatprep.subr.bf16.mxu0 0
    %655 = vmatpush1.bf16.xpose.msra.mxu0 0
    %656 = vmatprep.subr.bf16.mxu0 0
    %657 = vmatpush1.bf16.xpose.msra.mxu0 0
    %658 = vmatprep.subr.bf16.mxu0 0
    %659 = vmatpush1.bf16.xpose.msra.mxu0 0
    %660 = vmatprep.subr.bf16.mxu0 0
    %661 = vmatpush1.bf16.xpose.msra.mxu0 0
    %662 = vmatprep.subr.bf16.mxu0 0
    %663 = vmatpush1.bf16.xpose.msra.mxu0 0
    %664 = vmatprep.subr.bf16.mxu0 0
    %665 = vmatpush1.bf16.xpose.msra.mxu0 0
    %666 = vmatprep.subr.bf16.mxu0 0
    %667 = vmatpush1.bf16.xpose.msra.mxu0 0
    %668 = vmatprep.subr.bf16.mxu0 0
    %669 = vmatpush1.bf16.xpose.msra.mxu0 0
    %670 = vmatprep.subr.bf16.mxu0 0
    %671 = vmatpush1.bf16.xpose.msra.mxu0 0
    %672 = vmatprep.subr.bf16.mxu0 0
    %673 = vmatpush1.bf16.xpose.msra.mxu0 0
    %674 = vmatprep.subr.bf16.mxu0 0
    %675 = vmatpush1.bf16.xpose.msra.mxu0 0
    %676 = vmatprep.subr.bf16.mxu0 0
    %677 = vmatpush1.bf16.xpose.msra.mxu0 0
    %678 = vmatprep.subr.bf16.mxu0 0
    %679 = vmatpush1.bf16.xpose.msra.mxu0 0
    %680 = vmatprep.subr.bf16.mxu0 0
    %681 = vmatpush1.bf16.xpose.msra.mxu0 0
    %682 = vmatprep.mubr.bf16.mxu0 0
    %683 = vmatmul.mubr.bf16.gmra.mrb[0].mxu0 %v645
    %v684 = vpop.f32.mrb[0].mxu0
    %v685 = vadd.f32 0.0, %v684
    %v686 = vpop.f32.mrb[0].mxu0
    %v687 = vpop.f32.mrb[0].mxu0
    %v688 = vpop.f32.mrb[0].mxu0
    %689 = vdwg.mxu0
    %691 = vrot.lane.b32.xlu0 %v423, 120
    %v692 = vpop.permute.xlu0 %691
    %694 = vrot.lane.b32.xlu0 %v425, 120
    %v695 = vpop.permute.xlu0 %694
    %v697 = vsel %vm428, %v692, 0
    %v700 = vsel %vm428, %v695, 0
    %702 = vmatprep.subr.bf16.mxu0 0
    %703 = vmatpush1.bf16.xpose.msra.mxu0 %v700
    %704 = vmatprep.subr.bf16.mxu0 0
    %705 = vmatpush1.bf16.xpose.msra.mxu0 0
    %706 = vmatprep.subr.bf16.mxu0 0
    %707 = vmatpush1.bf16.xpose.msra.mxu0 0
    %708 = vmatprep.subr.bf16.mxu0 0
    %709 = vmatpush1.bf16.xpose.msra.mxu0 0
    %710 = vmatprep.subr.bf16.mxu0 0
    %711 = vmatpush1.bf16.xpose.msra.mxu0 0
    %712 = vmatprep.subr.bf16.mxu0 0
    %713 = vmatpush1.bf16.xpose.msra.mxu0 0
    %714 = vmatprep.subr.bf16.mxu0 0
    %715 = vmatpush1.bf16.xpose.msra.mxu0 0
    %716 = vmatprep.subr.bf16.mxu0 0
    %717 = vmatpush1.bf16.xpose.msra.mxu0 0
    %718 = vmatprep.subr.bf16.mxu0 0
    %719 = vmatpush1.bf16.xpose.msra.mxu0 0
    %720 = vmatprep.subr.bf16.mxu0 0
    %721 = vmatpush1.bf16.xpose.msra.mxu0 0
    %722 = vmatprep.subr.bf16.mxu0 0
    %723 = vmatpush1.bf16.xpose.msra.mxu0 0
    %724 = vmatprep.subr.bf16.mxu0 0
    %725 = vmatpush1.bf16.xpose.msra.mxu0 0
    %726 = vmatprep.subr.bf16.mxu0 0
    %727 = vmatpush1.bf16.xpose.msra.mxu0 0
    %728 = vmatprep.subr.bf16.mxu0 0
    %729 = vmatpush1.bf16.xpose.msra.mxu0 0
    %730 = vmatprep.subr.bf16.mxu0 0
    %731 = vmatpush1.bf16.xpose.msra.mxu0 0
    %732 = vmatprep.subr.bf16.mxu0 0
    %733 = vmatpush1.bf16.xpose.msra.mxu0 0
    %734 = vmatprep.mubr.bf16.mxu0 0
    %735 = vmatmul.mubr.bf16.gmra.mrb[0].mxu0 %v697
    %v736 = vpop.f32.mrb[0].mxu0
    %v737 = vadd.f32 0.0, %v736
    %v738 = vpop.f32.mrb[0].mxu0
    %v739 = vpop.f32.mrb[0].mxu0
    %v740 = vpop.f32.mrb[0].mxu0
    %741 = vdwg.mxu0
    %v742 = vsel %vm428, %v685, -inf
    %743 = vmax.xlane.f32.xlu0 %v742
    %v744 = vpop.xlane.xlu0 %743
    %v745 = vsel %vm428, %v737, -inf
    %746 = vmax.xlane.f32.xlu0 %v745
    %v747 = vpop.xlane.xlu0 %746
    %v748 = vsub.f32 %v685, %v744
    %v749 = vsub.f32 %v737, %v747
    %v750 = vmul.f32 %v748, 1.442695
    %v751 = vpow.pop %v750
    %v752 = vmul.f32 %v749, 1.442695
    %v753 = vpow.pop %v752
    %v754 = vsel %vm428, %v751, 0.0
    %755 = vadd.xlane.f32.xlu0 %v754
    %v756 = vpop.xlane.xlu0 %755
    %v757 = vsel %vm428, %v753, 0.0
    %758 = vadd.xlane.f32.xlu0 %v757
    %v759 = vpop.xlane.xlu0 %758
    %v760 = vrcp.pop %v756
    %v761 = vrcp.pop %v759
    %v762 = vmul.f32 %v751, %v760
    %v763 = vmul.f32 %v753, %v761
    %v764 = vpack.c.bf16 %v762, %v762
    %v765 = vpack.c.bf16 %v763, %v763
    %767 = vrot.lane.b32.xlu0 %v426, 120
    %v768 = vpop.permute.xlu0 %767
    %v770 = vsel %vm428, %v764, 0
    %v773 = vsel %vm548, %v768, 0
    %775 = vmatprep.subr.bf16.mxu0 0
    %776 = vmatpush1.bf16.msra.mxu0 %v773
    %777 = vmatprep.subr.bf16.mxu0 0
    %778 = vmatpush1.bf16.msra.mxu0 0
    %779 = vmatprep.subr.bf16.mxu0 0
    %780 = vmatpush1.bf16.msra.mxu0 0
    %781 = vmatprep.subr.bf16.mxu0 0
    %782 = vmatpush1.bf16.msra.mxu0 0
    %783 = vmatprep.subr.bf16.mxu0 0
    %784 = vmatpush1.bf16.msra.mxu0 0
    %785 = vmatprep.subr.bf16.mxu0 0
    %786 = vmatpush1.bf16.msra.mxu0 0
    %787 = vmatprep.subr.bf16.mxu0 0
    %788 = vmatpush1.bf16.msra.mxu0 0
    %789 = vmatprep.subr.bf16.mxu0 0
    %790 = vmatpush1.bf16.msra.mxu0 0
    %791 = vmatprep.subr.bf16.mxu0 0
    %792 = vmatpush1.bf16.msra.mxu0 0
    %793 = vmatprep.subr.bf16.mxu0 0
    %794 = vmatpush1.bf16.msra.mxu0 0
    %795 = vmatprep.subr.bf16.mxu0 0
    %796 = vmatpush1.bf16.msra.mxu0 0
    %797 = vmatprep.subr.bf16.mxu0 0
    %798 = vmatpush1.bf16.msra.mxu0 0
    %799 = vmatprep.subr.bf16.mxu0 0
    %800 = vmatpush1.bf16.msra.mxu0 0
    %801 = vmatprep.subr.bf16.mxu0 0
    %802 = vmatpush1.bf16.msra.mxu0 0
    %803 = vmatprep.subr.bf16.mxu0 0
    %804 = vmatpush1.bf16.msra.mxu0 0
    %805 = vmatprep.subr.bf16.mxu0 0
    %806 = vmatpush1.bf16.msra.mxu0 0
    %807 = vmatprep.mubr.bf16.mxu0 0
    %808 = vmatmul.mubr.bf16.gmra.mrb[0].mxu0 %v770
    %v809 = vpop.f32.mrb[0].mxu0
    %v810 = vadd.f32 0.0, %v809
    %v811 = vpop.f32.mrb[0].mxu0
    %v812 = vpop.f32.mrb[0].mxu0
    %v813 = vpop.f32.mrb[0].mxu0
    %814 = vdwg.mxu0
    %816 = vrot.lane.b32.xlu0 %v427, 120
    %v817 = vpop.permute.xlu0 %816
    %v819 = vsel %vm428, %v765, 0
    %v822 = vsel %vm548, %v817, 0
    %824 = vmatprep.subr.bf16.mxu0 0
    %825 = vmatpush1.bf16.msra.mxu0 %v822
    %826 = vmatprep.subr.bf16.mxu0 0
    %827 = vmatpush1.bf16.msra.mxu0 0
    %828 = vmatprep.subr.bf16.mxu0 0
    %829 = vmatpush1.bf16.msra.mxu0 0
    %830 = vmatprep.subr.bf16.mxu0 0
    %831 = vmatpush1.bf16.msra.mxu0 0
    %832 = vmatprep.subr.bf16.mxu0 0
    %833 = vmatpush1.bf16.msra.mxu0 0
    %834 = vmatprep.subr.bf16.mxu0 0
    %835 = vmatpush1.bf16.msra.mxu0 0
    %836 = vmatprep.subr.bf16.mxu0 0
    %837 = vmatpush1.bf16.msra.mxu0 0
    %838 = vmatprep.subr.bf16.mxu0 0
    %839 = vmatpush1.bf16.msra.mxu0 0
    %840 = vmatprep.subr.bf16.mxu0 0
    %841 = vmatpush1.bf16.msra.mxu0 0
    %842 = vmatprep.subr.bf16.mxu0 0
    %843 = vmatpush1.bf16.msra.mxu0 0
    %844 = vmatprep.subr.bf16.mxu0 0
    %845 = vmatpush1.bf16.msra.mxu0 0
    %846 = vmatprep.subr.bf16.mxu0 0
    %847 = vmatpush1.bf16.msra.mxu0 0
    %848 = vmatprep.subr.bf16.mxu0 0
    %849 = vmatpush1.bf16.msra.mxu0 0
    %850 = vmatprep.subr.bf16.mxu0 0
    %851 = vmatpush1.bf16.msra.mxu0 0
    %852 = vmatprep.subr.bf16.mxu0 0
    %853 = vmatpush1.bf16.msra.mxu0 0
    %854 = vmatprep.subr.bf16.mxu0 0
    %855 = vmatpush1.bf16.msra.mxu0 0
    %856 = vmatprep.mubr.bf16.mxu0 0
    %857 = vmatmul.mubr.bf16.gmra.mrb[0].mxu0 %v819
    %v858 = vpop.f32.mrb[0].mxu0
    %v859 = vadd.f32 0.0, %v858
    %v860 = vpop.f32.mrb[0].mxu0
    %v861 = vpop.f32.mrb[0].mxu0
    %v862 = vpop.f32.mrb[0].mxu0
    %863 = vdwg.mxu0
    %864 = vrot.lane.b32.xlu0 %v422, 112
    %v865 = vpop.permute.xlu0 %864
    %866 = vrot.lane.b32.xlu0 %v424, 112
    %v867 = vpop.permute.xlu0 %866
    %v869 = vsel %vm428, %v865, 0
    %v872 = vsel %vm428, %v867, 0
    %874 = vmatprep.subr.bf16.mxu0 0
    %875 = vmatpush1.bf16.xpose.msra.mxu0 %v872
    %876 = vmatprep.subr.bf16.mxu0 0
    %877 = vmatpush1.bf16.xpose.msra.mxu0 0
    %878 = vmatprep.subr.bf16.mxu0 0
    %879 = vmatpush1.bf16.xpose.msra.mxu0 0
    %880 = vmatprep.subr.bf16.mxu0 0
    %881 = vmatpush1.bf16.xpose.msra.mxu0 0
    %882 = vmatprep.subr.bf16.mxu0 0
    %883 = vmatpush1.bf16.xpose.msra.mxu0 0
    %884 = vmatprep.subr.bf16.mxu0 0
    %885 = vmatpush1.bf16.xpose.msra.mxu0 0
    %886 = vmatprep.subr.bf16.mxu0 0
    %887 = vmatpush1.bf16.xpose.msra.mxu0 0
    %888 = vmatprep.subr.bf16.mxu0 0
    %889 = vmatpush1.bf16.xpose.msra.mxu0 0
    %890 = vmatprep.subr.bf16.mxu0 0
    %891 = vmatpush1.bf16.xpose.msra.mxu0 0
    %892 = vmatprep.subr.bf16.mxu0 0
    %893 = vmatpush1.bf16.xpose.msra.mxu0 0
    %894 = vmatprep.subr.bf16.mxu0 0
    %895 = vmatpush1.bf16.xpose.msra.mxu0 0
    %896 = vmatprep.subr.bf16.mxu0 0
    %897 = vmatpush1.bf16.xpose.msra.mxu0 0
    %898 = vmatprep.subr.bf16.mxu0 0
    %899 = vmatpush1.bf16.xpose.msra.mxu0 0
    %900 = vmatprep.subr.bf16.mxu0 0
    %901 = vmatpush1.bf16.xpose.msra.mxu0 0
    %902 = vmatprep.subr.bf16.mxu0 0
    %903 = vmatpush1.bf16.xpose.msra.mxu0 0
    %904 = vmatprep.subr.bf16.mxu0 0
    %905 = vmatpush1.bf16.xpose.msra.mxu0 0
    %906 = vmatprep.mubr.bf16.mxu0 0
    %907 = vmatmul.mubr.bf16.gmra.mrb[0].mxu0 %v869
    %v908 = vpop.f32.mrb[0].mxu0
    %v909 = vadd.f32 0.0, %v908
    %v910 = vpop.f32.mrb[0].mxu0
    %v911 = vpop.f32.mrb[0].mxu0
    %v912 = vpop.f32.mrb[0].mxu0
    %913 = vdwg.mxu0
    %914 = vrot.lane.b32.xlu0 %v423, 112
    %v915 = vpop.permute.xlu0 %914
    %916 = vrot.lane.b32.xlu0 %v425, 112
    %v917 = vpop.permute.xlu0 %916
    %v919 = vsel %vm428, %v915, 0
    %v922 = vsel %vm428, %v917, 0
    %924 = vmatprep.subr.bf16.mxu0 0
    %925 = vmatpush1.bf16.xpose.msra.mxu0 %v922
    %926 = vmatprep.subr.bf16.mxu0 0
    %927 = vmatpush1.bf16.xpose.msra.mxu0 0
    %928 = vmatprep.subr.bf16.mxu0 0
    %929 = vmatpush1.bf16.xpose.msra.mxu0 0
    %930 = vmatprep.subr.bf16.mxu0 0
    %931 = vmatpush1.bf16.xpose.msra.mxu0 0
    %932 = vmatprep.subr.bf16.mxu0 0
    %933 = vmatpush1.bf16.xpose.msra.mxu0 0
    %934 = vmatprep.subr.bf16.mxu0 0
    %935 = vmatpush1.bf16.xpose.msra.mxu0 0
    %936 = vmatprep.subr.bf16.mxu0 0
    %937 = vmatpush1.bf16.xpose.msra.mxu0 0
    %938 = vmatprep.subr.bf16.mxu0 0
    %939 = vmatpush1.bf16.xpose.msra.mxu0 0
    %940 = vmatprep.subr.bf16.mxu0 0
    %941 = vmatpush1.bf16.xpose.msra.mxu0 0
    %942 = vmatprep.subr.bf16.mxu0 0
    %943 = vmatpush1.bf16.xpose.msra.mxu0 0
    %944 = vmatprep.subr.bf16.mxu0 0
    %945 = vmatpush1.bf16.xpose.msra.mxu0 0
    %946 = vmatprep.subr.bf16.mxu0 0
    %947 = vmatpush1.bf16.xpose.msra.mxu0 0
    %948 = vmatprep.subr.bf16.mxu0 0
    %949 = vmatpush1.bf16.xpose.msra.mxu0 0
    %950 = vmatprep.subr.bf16.mxu0 0
    %951 = vmatpush1.bf16.xpose.msra.mxu0 0
    %952 = vmatprep.subr.bf16.mxu0 0
    %953 = vmatpush1.bf16.xpose.msra.mxu0 0
    %954 = vmatprep.subr.bf16.mxu0 0
    %955 = vmatpush1.bf16.xpose.msra.mxu0 0
    %956 = vmatprep.mubr.bf16.mxu0 0
    %957 = vmatmul.mubr.bf16.gmra.mrb[0].mxu0 %v919
    %v958 = vpop.f32.mrb[0].mxu0
    %v959 = vadd.f32 0.0, %v958
    %v960 = vpop.f32.mrb[0].mxu0
    %v961 = vpop.f32.mrb[0].mxu0
    %v962 = vpop.f32.mrb[0].mxu0
    %963 = vdwg.mxu0
    %v964 = vsel %vm428, %v909, -inf
    %965 = vmax.xlane.f32.xlu0 %v964
    %v966 = vpop.xlane.xlu0 %965
    %v967 = vsel %vm428, %v959, -inf
    %968 = vmax.xlane.f32.xlu0 %v967
    %v969 = vpop.xlane.xlu0 %968
    %v970 = vsub.f32 %v909, %v966
    %v971 = vsub.f32 %v959, %v969
    %v972 = vmul.f32 %v970, 1.442695
    %v973 = vpow.pop %v972
    %v974 = vmul.f32 %v971, 1.442695
    %v975 = vpow.pop %v974
    %v976 = vsel %vm428, %v973, 0.0
    %977 = vadd.xlane.f32.xlu0 %v976
    %v978 = vpop.xlane.xlu0 %977
    %v979 = vsel %vm428, %v975, 0.0
    %980 = vadd.xlane.f32.xlu0 %v979
    %v981 = vpop.xlane.xlu0 %980
    %v982 = vrcp.pop %v978
    %v983 = vrcp.pop %v981
    %v984 = vmul.f32 %v973, %v982
    %v985 = vmul.f32 %v975, %v983
    %v986 = vpack.c.bf16 %v984, %v984
    %v987 = vpack.c.bf16 %v985, %v985
    %988 = vrot.lane.b32.xlu0 %v426, 112
    %v989 = vpop.permute.xlu0 %988
    %v991 = vsel %vm428, %v986, 0
    %v994 = vsel %vm548, %v989, 0
    %996 = vmatprep.subr.bf16.mxu0 0
    %997 = vmatpush1.bf16.msra.mxu0 %v994
    %998 = vmatprep.subr.bf16.mxu0 0
    %999 = vmatpush1.bf16.msra.mxu0 0
    %1000 = vmatprep.subr.bf16.mxu0 0
    %1001 = vmatpush1.bf16.msra.mxu0 0
    %1002 = vmatprep.subr.bf16.mxu0 0
    %1003 = vmatpush1.bf16.msra.mxu0 0
    %1004 = vmatprep.subr.bf16.mxu0 0
    %1005 = vmatpush1.bf16.msra.mxu0 0
    %1006 = vmatprep.subr.bf16.mxu0 0
    %1007 = vmatpush1.bf16.msra.mxu0 0
    %1008 = vmatprep.subr.bf16.mxu0 0
    %1009 = vmatpush1.bf16.msra.mxu0 0
    %1010 = vmatprep.subr.bf16.mxu0 0
    %1011 = vmatpush1.bf16.msra.mxu0 0
    %1012 = vmatprep.subr.bf16.mxu0 0
    %1013 = vmatpush1.bf16.msra.mxu0 0
    %1014 = vmatprep.subr.bf16.mxu0 0
    %1015 = vmatpush1.bf16.msra.mxu0 0
    %1016 = vmatprep.subr.bf16.mxu0 0
    %1017 = vmatpush1.bf16.msra.mxu0 0
    %1018 = vmatprep.subr.bf16.mxu0 0
    %1019 = vmatpush1.bf16.msra.mxu0 0
    %1020 = vmatprep.subr.bf16.mxu0 0
    %1021 = vmatpush1.bf16.msra.mxu0 0
    %1022 = vmatprep.subr.bf16.mxu0 0
    %1023 = vmatpush1.bf16.msra.mxu0 0
    %1024 = vmatprep.subr.bf16.mxu0 0
    %1025 = vmatpush1.bf16.msra.mxu0 0
    %1026 = vmatprep.subr.bf16.mxu0 0
    %1027 = vmatpush1.bf16.msra.mxu0 0
    %1028 = vmatprep.mubr.bf16.mxu0 0
    %1029 = vmatmul.mubr.bf16.gmra.mrb[0].mxu0 %v991
    %v1030 = vpop.f32.mrb[0].mxu0
    %v1031 = vadd.f32 0.0, %v1030
    %v1032 = vpop.f32.mrb[0].mxu0
    %v1033 = vpop.f32.mrb[0].mxu0
    %v1034 = vpop.f32.mrb[0].mxu0
    %1035 = vdwg.mxu0
    %1036 = vrot.lane.b32.xlu0 %v427, 112
    %v1037 = vpop.permute.xlu0 %1036
    %v1039 = vsel %vm428, %v987, 0
    %v1042 = vsel %vm548, %v1037, 0
    %1044 = vmatprep.subr.bf16.mxu0 0
    %1045 = vmatpush1.bf16.msra.mxu0 %v1042
    %1046 = vmatprep.subr.bf16.mxu0 0
    %1047 = vmatpush1.bf16.msra.mxu0 0
    %1048 = vmatprep.subr.bf16.mxu0 0
    %1049 = vmatpush1.bf16.msra.mxu0 0
    %1050 = vmatprep.subr.bf16.mxu0 0
    %1051 = vmatpush1.bf16.msra.mxu0 0
    %1052 = vmatprep.subr.bf16.mxu0 0
    %1053 = vmatpush1.bf16.msra.mxu0 0
    %1054 = vmatprep.subr.bf16.mxu0 0
    %1055 = vmatpush1.bf16.msra.mxu0 0
    %1056 = vmatprep.subr.bf16.mxu0 0
    %1057 = vmatpush1.bf16.msra.mxu0 0
    %1058 = vmatprep.subr.bf16.mxu0 0
    %1059 = vmatpush1.bf16.msra.mxu0 0
    %1060 = vmatprep.subr.bf16.mxu0 0
    %1061 = vmatpush1.bf16.msra.mxu0 0
    %1062 = vmatprep.subr.bf16.mxu0 0
    %1063 = vmatpush1.bf16.msra.mxu0 0
    %1064 = vmatprep.subr.bf16.mxu0 0
    %1065 = vmatpush1.bf16.msra.mxu0 0
    %1066 = vmatprep.subr.bf16.mxu0 0
    %1067 = vmatpush1.bf16.msra.mxu0 0
    %1068 = vmatprep.subr.bf16.mxu0 0
    %1069 = vmatpush1.bf16.msra.mxu0 0
    %1070 = vmatprep.subr.bf16.mxu0 0
    %1071 = vmatpush1.bf16.msra.mxu0 0
    %1072 = vmatprep.subr.bf16.mxu0 0
    %1073 = vmatpush1.bf16.msra.mxu0 0
    %1074 = vmatprep.subr.bf16.mxu0 0
    %1075 = vmatpush1.bf16.msra.mxu0 0
    %1076 = vmatprep.mubr.bf16.mxu0 0
    %1077 = vmatmul.mubr.bf16.gmra.mrb[0].mxu0 %v1039
    %v1078 = vpop.f32.mrb[0].mxu0
    %v1079 = vadd.f32 0.0, %v1078
    %v1080 = vpop.f32.mrb[0].mxu0
    %v1081 = vpop.f32.mrb[0].mxu0
    %v1082 = vpop.f32.mrb[0].mxu0
    %1083 = vdwg.mxu0
    %1084 = vrot.lane.b32.xlu0 %v422, 104
    %v1085 = vpop.permute.xlu0 %1084
    %1086 = vrot.lane.b32.xlu0 %v424, 104
    %v1087 = vpop.permute.xlu0 %1086
    %v1089 = vsel %vm428, %v1085, 0
    %v1092 = vsel %vm428, %v1087, 0
    %1094 = vmatprep.subr.bf16.mxu0 0
    %1095 = vmatpush1.bf16.xpose.msra.mxu0 %v1092
    %1096 = vmatprep.subr.bf16.mxu0 0
    %1097 = vmatpush1.bf16.xpose.msra.mxu0 0
    %1098 = vmatprep.subr.bf16.mxu0 0
    %1099 = vmatpush1.bf16.xpose.msra.mxu0 0
    %1100 = vmatprep.subr.bf16.mxu0 0
    %1101 = vmatpush1.bf16.xpose.msra.mxu0 0
    %1102 = vmatprep.subr.bf16.mxu0 0
    %1103 = vmatpush1.bf16.xpose.msra.mxu0 0
    %1104 = vmatprep.subr.bf16.mxu0 0
    %1105 = vmatpush1.bf16.xpose.msra.mxu0 0
    %1106 = vmatprep.subr.bf16.mxu0 0
    %1107 = vmatpush1.bf16.xpose.msra.mxu0 0
    %1108 = vmatprep.subr.bf16.mxu0 0
    %1109 = vmatpush1.bf16.xpose.msra.mxu0 0
    %1110 = vmatprep.subr.bf16.mxu0 0
    %1111 = vmatpush1.bf16.xpose.msra.mxu0 0
    %1112 = vmatprep.subr.bf16.mxu0 0
    %1113 = vmatpush1.bf16.xpose.msra.mxu0 0
    %1114 = vmatprep.subr.bf16.mxu0 0
    %1115 = vmatpush1.bf16.xpose.msra.mxu0 0
    %1116 = vmatprep.subr.bf16.mxu0 0
    %1117 = vmatpush1.bf16.xpose.msra.mxu0 0
    %1118 = vmatprep.subr.bf16.mxu0 0
    %1119 = vmatpush1.bf16.xpose.msra.mxu0 0
    %1120 = vmatprep.subr.bf16.mxu0 0
    %1121 = vmatpush1.bf16.xpose.msra.mxu0 0
    %1122 = vmatprep.subr.bf16.mxu0 0
    %1123 = vmatpush1.bf16.xpose.msra.mxu0 0
    %1124 = vmatprep.subr.bf16.mxu0 0
    %1125 = vmatpush1.bf16.xpose.msra.mxu0 0
    %1126 = vmatprep.mubr.bf16.mxu0 0
    %1127 = vmatmul.mubr.bf16.gmra.mrb[0].mxu0 %v1089
    %v1128 = vpop.f32.mrb[0].mxu0
    %v1129 = vadd.f32 0.0, %v1128
    %v1130 = vpop.f32.mrb[0].mxu0
    %v1131 = vpop.f32.mrb[0].mxu0
    %v1132 = vpop.f32.mrb[0].mxu0
    %1133 = vdwg.mxu0
    %1134 = vrot.lane.b32.xlu0 %v423, 104
    %v1135 = vpop.permute.xlu0 %1134
    %1136 = vrot.lane.b32.xlu0 %v425, 104
    %v1137 = vpop.permute.xlu0 %1136
    %v1139 = vsel %vm428, %v1135, 0
    %v1142 = vsel %vm428, %v1137, 0
    %1144 = vmatprep.subr.bf16.mxu0 0
    %1145 = vmatpush1.bf16.xpose.msra.mxu0 %v1142
    %1146 = vmatprep.subr.bf16.mxu0 0
    %1147 = vmatpush1.bf16.xpose.msra.mxu0 0
    %1148 = vmatprep.subr.bf16.mxu0 0
    %1149 = vmatpush1.bf16.xpose.msra.mxu0 0
    %1150 = vmatprep.subr.bf16.mxu0 0
    %1151 = vmatpush1.bf16.xpose.msra.mxu0 0
    %1152 = vmatprep.subr.bf16.mxu0 0
    %1153 = vmatpush1.bf16.xpose.msra.mxu0 0
    %1154 = vmatprep.subr.bf16.mxu0 0
    %1155 = vmatpush1.bf16.xpose.msra.mxu0 0
    %1156 = vmatprep.subr.bf16.mxu0 0
    %1157 = vmatpush1.bf16.xpose.msra.mxu0 0
    %1158 = vmatprep.subr.bf16.mxu0 0
    %1159 = vmatpush1.bf16.xpose.msra.mxu0 0
    %1160 = vmatprep.subr.bf16.mxu0 0
    %1161 = vmatpush1.bf16.xpose.msra.mxu0 0
    %1162 = vmatprep.subr.bf16.mxu0 0
    %1163 = vmatpush1.bf16.xpose.msra.mxu0 0
    %1164 = vmatprep.subr.bf16.mxu0 0
    %1165 = vmatpush1.bf16.xpose.msra.mxu0 0
    %1166 = vmatprep.subr.bf16.mxu0 0
    %1167 = vmatpush1.bf16.xpose.msra.mxu0 0
    %1168 = vmatprep.subr.bf16.mxu0 0
    %1169 = vmatpush1.bf16.xpose.msra.mxu0 0
    %1170 = vmatprep.subr.bf16.mxu0 0
    %1171 = vmatpush1.bf16.xpose.msra.mxu0 0
    %1172 = vmatprep.subr.bf16.mxu0 0
    %1173 = vmatpush1.bf16.xpose.msra.mxu0 0
    %1174 = vmatprep.subr.bf16.mxu0 0
    %1175 = vmatpush1.bf16.xpose.msra.mxu0 0
    %1176 = vmatprep.mubr.bf16.mxu0 0
    %1177 = vmatmul.mubr.bf16.gmra.mrb[0].mxu0 %v1139
    %v1178 = vpop.f32.mrb[0].mxu0
    %v1179 = vadd.f32 0.0, %v1178
    %v1180 = vpop.f32.mrb[0].mxu0
    %v1181 = vpop.f32.mrb[0].mxu0
    %v1182 = vpop.f32.mrb[0].mxu0
    %1183 = vdwg.mxu0
    %v1184 = vsel %vm428, %v1129, -inf
    %1185 = vmax.xlane.f32.xlu0 %v1184
    %v1186 = vpop.xlane.xlu0 %1185
    %v1187 = vsel %vm428, %v1179, -inf
    %1188 = vmax.xlane.f32.xlu0 %v1187
    %v1189 = vpop.xlane.xlu0 %1188
    %v1190 = vsub.f32 %v1129, %v1186
    %v1191 = vsub.f32 %v1179, %v1189
    %v1192 = vmul.f32 %v1190, 1.442695
    %v1193 = vpow.pop %v1192
    %v1194 = vmul.f32 %v1191, 1.442695
    %v1195 = vpow.pop %v1194
    %v1196 = vsel %vm428, %v1193, 0.0
    %1197 = vadd.xlane.f32.xlu0 %v1196
    %v1198 = vpop.xlane.xlu0 %1197
    %v1199 = vsel %vm428, %v1195, 0.0
    %1200 = vadd.xlane.f32.xlu0 %v1199
    %v1201 = vpop.xlane.xlu0 %1200
    %v1202 = vrcp.pop %v1198
    %v1203 = vrcp.pop %v1201
    %v1204 = vmul.f32 %v1193, %v1202
    %v1205 = vmul.f32 %v1195, %v1203
    %v1206 = vpack.c.bf16 %v1204, %v1204
    %v1207 = vpack.c.bf16 %v1205, %v1205
    %1208 = vrot.lane.b32.xlu0 %v426, 104
    %v1209 = vpop.permute.xlu0 %1208
    %v1211 = vsel %vm428, %v1206, 0
    %v1214 = vsel %vm548, %v1209, 0
    %1216 = vmatprep.subr.bf16.mxu0 0
    %1217 = vmatpush1.bf16.msra.mxu0 %v1214
    %1218 = vmatprep.subr.bf16.mxu0 0
    %1219 = vmatpush1.bf16.msra.mxu0 0
    %1220 = vmatprep.subr.bf16.mxu0 0
    %1221 = vmatpush1.bf16.msra.mxu0 0
    %1222 = vmatprep.subr.bf16.mxu0 0
    %1223 = vmatpush1.bf16.msra.mxu0 0
    %1224 = vmatprep.subr.bf16.mxu0 0
    %1225 = vmatpush1.bf16.msra.mxu0 0
    %1226 = vmatprep.subr.bf16.mxu0 0
    %1227 = vmatpush1.bf16.msra.mxu0 0
    %1228 = vmatprep.subr.bf16.mxu0 0
    %1229 = vmatpush1.bf16.msra.mxu0 0
    %1230 = vmatprep.subr.bf16.mxu0 0
    %1231 = vmatpush1.bf16.msra.mxu0 0
    %1232 = vmatprep.subr.bf16.mxu0 0
    %1233 = vmatpush1.bf16.msra.mxu0 0
    %1234 = vmatprep.subr.bf16.mxu0 0
    %1235 = vmatpush1.bf16.msra.mxu0 0
    %1236 = vmatprep.subr.bf16.mxu0 0
    %1237 = vmatpush1.bf16.msra.mxu0 0
    %1238 = vmatprep.subr.bf16.mxu0 0
    %1239 = vmatpush1.bf16.msra.mxu0 0
    %1240 = vmatprep.subr.bf16.mxu0 0
    %1241 = vmatpush1.bf16.msra.mxu0 0
    %1242 = vmatprep.subr.bf16.mxu0 0
    %1243 = vmatpush1.bf16.msra.mxu0 0
    %1244 = vmatprep.subr.bf16.mxu0 0
    %1245 = vmatpush1.bf16.msra.mxu0 0
    %1246 = vmatprep.subr.bf16.mxu0 0
    %1247 = vmatpush1.bf16.msra.mxu0 0
    %1248 = vmatprep.mubr.bf16.mxu0 0
    %1249 = vmatmul.mubr.bf16.gmra.mrb[0].mxu0 %v1211
    %v1250 = vpop.f32.mrb[0].mxu0
    %v1251 = vadd.f32 0.0, %v1250
    %v1252 = vpop.f32.mrb[0].mxu0
    %v1253 = vpop.f32.mrb[0].mxu0
    %v1254 = vpop.f32.mrb[0].mxu0
    %1255 = vdwg.mxu0
    %1256 = vrot.lane.b32.xlu0 %v427, 104
    %v1257 = vpop.permute.xlu0 %1256
    %v1259 = vsel %vm428, %v1207, 0
    %v1262 = vsel %vm548, %v1257, 0
    %1264 = vmatprep.subr.bf16.mxu0 0
    %1265 = vmatpush1.bf16.msra.mxu0 %v1262
    %1266 = vmatprep.subr.bf16.mxu0 0
    %1267 = vmatpush1.bf16.msra.mxu0 0
    %1268 = vmatprep.subr.bf16.mxu0 0
    %1269 = vmatpush1.bf16.msra.mxu0 0
    %1270 = vmatprep.subr.bf16.mxu0 0
    %1271 = vmatpush1.bf16.msra.mxu0 0
    %1272 = vmatprep.subr.bf16.mxu0 0
    %1273 = vmatpush1.bf16.msra.mxu0 0
    %1274 = vmatprep.subr.bf16.mxu0 0
    %1275 = vmatpush1.bf16.msra.mxu0 0
    %1276 = vmatprep.subr.bf16.mxu0 0
    %1277 = vmatpush1.bf16.msra.mxu0 0
    %1278 = vmatprep.subr.bf16.mxu0 0
    %1279 = vmatpush1.bf16.msra.mxu0 0
    %1280 = vmatprep.subr.bf16.mxu0 0
    %1281 = vmatpush1.bf16.msra.mxu0 0
    %1282 = vmatprep.subr.bf16.mxu0 0
    %1283 = vmatpush1.bf16.msra.mxu0 0
    %1284 = vmatprep.subr.bf16.mxu0 0
    %1285 = vmatpush1.bf16.msra.mxu0 0
    %1286 = vmatprep.subr.bf16.mxu0 0
    %1287 = vmatpush1.bf16.msra.mxu0 0
    %1288 = vmatprep.subr.bf16.mxu0 0
    %1289 = vmatpush1.bf16.msra.mxu0 0
    %1290 = vmatprep.subr.bf16.mxu0 0
    %1291 = vmatpush1.bf16.msra.mxu0 0
    %1292 = vmatprep.subr.bf16.mxu0 0
    %1293 = vmatpush1.bf16.msra.mxu0 0
    %1294 = vmatprep.subr.bf16.mxu0 0
    %1295 = vmatpush1.bf16.msra.mxu0 0
    %1296 = vmatprep.mubr.bf16.mxu0 0
    %1297 = vmatmul.mubr.bf16.gmra.mrb[0].mxu0 %v1259
    %v1298 = vpop.f32.mrb[0].mxu0
    %v1299 = vadd.f32 0.0, %v1298
    %v1300 = vpop.f32.mrb[0].mxu0
    %v1301 = vpop.f32.mrb[0].mxu0
    %v1302 = vpop.f32.mrb[0].mxu0
    %1303 = vdwg.mxu0
    %1304 = vst.msk [vmem:[#allocation23] sm:$0xff] %vm428, %v541
    %1305 = vst.msk [vmem:[#allocation23 + $0x8] sm:$0xff] %vm428, %v762
    %1306 = vst.msk [vmem:[#allocation23 + $0x10] sm:$0xff] %vm428, %v984
    %1307 = vst.msk [vmem:[#allocation23 + $0x18] sm:$0xff] %vm428, %v1204
    %1308 = vst.msk [vmem:[#allocation23 + $0x20] sm:$0xff] %vm428, %v542
    %1309 = vst.msk [vmem:[#allocation23 + $0x28] sm:$0xff] %vm428, %v763
    %1310 = vst.msk [vmem:[#allocation23 + $0x30] sm:$0xff] %vm428, %v985
    %1311 = vst.msk [vmem:[#allocation23 + $0x38] sm:$0xff] %vm428, %v1205
    %1314 = vrot.lane.b32.xlu0 %v810, 8
    %v1315 = vpop.permute.xlu0 %1314
    %1316 = vrot.lane.b32.xlu0 %v859, 8
    %v1317 = vpop.permute.xlu0 %1316
    %1322 = vrot.lane.b32.xlu0 %v1031, 16
    %v1323 = vpop.permute.xlu0 %1322
    %1324 = vrot.lane.b32.xlu0 %v1079, 16
    %v1325 = vpop.permute.xlu0 %1324
    %1330 = vrot.lane.b32.xlu0 %v1251, 24
    %v1331 = vpop.permute.xlu0 %1330
    %1332 = vrot.lane.b32.xlu0 %v1299, 24
    %v1333 = vpop.permute.xlu0 %1332
    %v1336 = vsel %vm428, %v587, %v1315
    %v1337 = vsel %vm428, %v633, %v1317
    %vm1338 = vcmask 130048
    %v1339 = vsel %vm1338, %v1336, %v1323
    %v1340 = vsel %vm1338, %v1337, %v1325
    %vm1341 = vcmask 195584
    %v1342 = vsel %vm1341, %v1339, %v1331
    %v1343 = vsel %vm1341, %v1340, %v1333
    %v1344 = vpack.c.bf16 %v1343, %v1342
    %v1345 = vld [vmem:[#allocation13] sm:$0xf]
    %v1346 = vld [vmem:[#allocation13 + $0x4] sm:$0xf]
    %v1347 = vld [vmem:[#allocation13 + $0x8] sm:$0xf]
    %v1348 = vld [vmem:[#allocation13 + $0xc] sm:$0xf]
    %v1353 = vunpack.c.l.b16 %v1345
    %v1354 = vunpack.c.l.b16 %v1346
    %v1355 = vunpack.c.l.b16 %v1347
    %v1356 = vunpack.c.l.b16 %v1348
    %v1357 = vpack.c.b16 %v1354, %v1353
    %v1358 = vpack.c.b16 %v1356, %v1355
    %v1362 = vsel %vm203, %v1344, 0
    %1364 = vmatprep.subr.bf16.mxu0 0
    %1365 = vmatpush1.bf16.msra.mxu0 %v1357
    %1366 = vmatprep.subr.bf16.mxu0 0
    %1367 = vmatpush1.bf16.msra.mxu0 %v1358
    %1368 = vmatprep.subr.bf16.mxu0 0
    %1369 = vmatpush1.bf16.msra.mxu0 0
    %1370 = vmatprep.subr.bf16.mxu0 0
    %1371 = vmatpush1.bf16.msra.mxu0 0
    %1372 = vmatprep.subr.bf16.mxu0 0
    %1373 = vmatpush1.bf16.msra.mxu0 0
    %1374 = vmatprep.subr.bf16.mxu0 0
    %1375 = vmatpush1.bf16.msra.mxu0 0
    %1376 = vmatprep.subr.bf16.mxu0 0
    %1377 = vmatpush1.bf16.msra.mxu0 0
    %1378 = vmatprep.subr.bf16.mxu0 0
    %1379 = vmatpush1.bf16.msra.mxu0 0
    %1380 = vmatprep.subr.bf16.mxu0 0
    %1381 = vmatpush1.bf16.msra.mxu0 0
    %1382 = vmatprep.subr.bf16.mxu0 0
    %1383 = vmatpush1.bf16.msra.mxu0 0
    %1384 = vmatprep.subr.bf16.mxu0 0
    %1385 = vmatpush1.bf16.msra.mxu0 0
    %1386 = vmatprep.subr.bf16.mxu0 0
    %1387 = vmatpush1.bf16.msra.mxu0 0
    %1388 = vmatprep.subr.bf16.mxu0 0
    %1389 = vmatpush1.bf16.msra.mxu0 0
    %1390 = vmatprep.subr.bf16.mxu0 0
    %1391 = vmatpush1.bf16.msra.mxu0 0
    %1392 = vmatprep.subr.bf16.mxu0 0
    %1393 = vmatpush1.bf16.msra.mxu0 0
    %1394 = vmatprep.subr.bf16.mxu0 0
    %1395 = vmatpush1.bf16.msra.mxu0 0
    %1396 = vmatprep.mubr.bf16.mxu0 0
    %1397 = vmatmul.mubr.bf16.gmra.mrb[0].mxu0 %v1362
    %v1398 = vpop.f32.mrb[0].mxu0
    %v1399 = vadd.f32 0.0, %v1398
    %v1400 = vpop.f32.mrb[0].mxu0
    %v1401 = vpop.f32.mrb[0].mxu0
    %v1402 = vadd.f32 0.0, %v1401
    %v1403 = vpop.f32.mrb[0].mxu0
    %1404 = vdwg.mxu0
    %v1405 = vadd.f32 %v199, %v1399
    %v1406 = vadd.f32 %v200, %v1402
    %v1407 = vld [vmem:[#allocation14] sm:$0x1]
    %v1409 = vlaneseq
    %v1410 = vshrl.u32 %v1409, 7
    %v1411 = vsub.s32 0, %v1410
    %v1412 = vrot.slane %v1407, %v1411
    %v1414 = vadd.f32 %v1405, %v1412
    %v1415 = vadd.f32 %v1406, %v1412
    %v1416 = vsel %vm203, %v1414, 0.0
    %1417 = vadd.xlane.f32.xlu0 %v1416
    %v1418 = vpop.xlane.xlu0 %1417
    %v1419 = vsel %vm203, %v1415, 0.0
    %1420 = vadd.xlane.f32.xlu0 %v1419
    %v1421 = vpop.xlane.xlu0 %1420
    %v1422 = vmul.f32 %v1418, %v210
    %v1423 = vmul.f32 %v1421, %v210
    %v1424 = vsub.f32 %v1414, %v1422
    %v1425 = vsub.f32 %v1415, %v1423
    %v1426 = vmul.f32 %v1424, %v1424
    %v1427 = vmul.f32 %v1425, %v1425
    %v1428 = vsel %vm203, %v1426, 0.0
    %1429 = vadd.xlane.f32.xlu0 %v1428
    %v1430 = vpop.xlane.xlu0 %1429
    %v1431 = vsel %vm203, %v1427, 0.0
    %1432 = vadd.xlane.f32.xlu0 %v1431
    %v1433 = vpop.xlane.xlu0 %1432
    %v1434 = vmul.f32 %v1430, %v210
    %v1435 = vmul.f32 %v1433, %v210
    %v1436 = vadd.f32 %v1434, 1e-05
    %v1437 = vadd.f32 %v1435, 1e-05
    %v1438 = vrsqrt.pop %v1436
    %v1439 = vrsqrt.pop %v1437
    %v1440 = vmul.f32 %v1424, %v1438
    %v1441 = vmul.f32 %v1425, %v1439
    %v1442 = vmul.f32 %v1440, %v235
    %v1443 = vmul.f32 %v1441, %v235
    %v1444 = vadd.f32 %v1442, %v243
    %v1445 = vadd.f32 %v1443, %v243
    %v1446 = vpack.c.bf16 %v1445, %v1444
    %v1447 = vld [vmem:[#allocation16] sm:$0xf]
    %v1448 = vld [vmem:[#allocation16 + $0x4] sm:$0xf]
    %v1449 = vld [vmem:[#allocation16 + $0x8] sm:$0xf]
    %v1450 = vld [vmem:[#allocation16 + $0xc] sm:$0xf]
    %v1451 = vld [vmem:[#allocation17] sm:$0x1]
    %v1453 = vlaneseq
    %v1454 = vshrl.u32 %v1453, 7
    %v1455 = vsub.s32 0, %v1454
    %v1456 = vrot.slane %v1451, %v1455
    %v1462 = vunpack.c.l.b16 %v1447
    %v1463 = vunpack.c.l.b16 %v1448
    %v1464 = vunpack.c.l.b16 %v1449
    %v1465 = vunpack.c.l.b16 %v1450
    %v1466 = vpack.c.b16 %v1463, %v1462
    %v1467 = vpack.c.b16 %v1465, %v1464
    %v1471 = vsel %vm203, %v1446, 0
    %1473 = vmatprep.subr.bf16.mxu0 0
    %1474 = vmatpush1.bf16.msra.mxu0 %v1466
    %1475 = vmatprep.subr.bf16.mxu0 0
    %1476 = vmatpush1.bf16.msra.mxu0 %v1467
    %1477 = vmatprep.subr.bf16.mxu0 0
    %1478 = vmatpush1.bf16.msra.mxu0 0
    %1479 = vmatprep.subr.bf16.mxu0 0
    %1480 = vmatpush1.bf16.msra.mxu0 0
    %1481 = vmatprep.subr.bf16.mxu0 0
    %1482 = vmatpush1.bf16.msra.mxu0 0
    %1483 = vmatprep.subr.bf16.mxu0 0
    %1484 = vmatpush1.bf16.msra.mxu0 0
    %1485 = vmatprep.subr.bf16.mxu0 0
    %1486 = vmatpush1.bf16.msra.mxu0 0
    %1487 = vmatprep.subr.bf16.mxu0 0
    %1488 = vmatpush1.bf16.msra.mxu0 0
    %1489 = vmatprep.subr.bf16.mxu0 0
    %1490 = vmatpush1.bf16.msra.mxu0 0
    %1491 = vmatprep.subr.bf16.mxu0 0
    %1492 = vmatpush1.bf16.msra.mxu0 0
    %1493 = vmatprep.subr.bf16.mxu0 0
    %1494 = vmatpush1.bf16.msra.mxu0 0
    %1495 = vmatprep.subr.bf16.mxu0 0
    %1496 = vmatpush1.bf16.msra.mxu0 0
    %1497 = vmatprep.subr.bf16.mxu0 0
    %1498 = vmatpush1.bf16.msra.mxu0 0
    %1499 = vmatprep.subr.bf16.mxu0 0
    %1500 = vmatpush1.bf16.msra.mxu0 0
    %1501 = vmatprep.subr.bf16.mxu0 0
    %1502 = vmatpush1.bf16.msra.mxu0 0
    %1503 = vmatprep.subr.bf16.mxu0 0
    %1504 = vmatpush1.bf16.msra.mxu0 0
    %1505 = vmatprep.mubr.bf16.mxu0 0
    %1506 = vmatmul.mubr.bf16.gmra.mrb[0].mxu0 %v1471
    %v1507 = vpop.f32.mrb[0].mxu0
    %v1508 = vadd.f32 %v1456, %v1507
    %v1509 = vpop.f32.mrb[0].mxu0
    %v1510 = vpop.f32.mrb[0].mxu0
    %v1511 = vadd.f32 %v1456, %v1510
    %v1512 = vpop.f32.mrb[0].mxu0
    %1513 = vdwg.mxu0
    %v1514 = vmul.f32 %v1508, 0.5
    %v1515 = vmul.f32 %v1511, 0.5
    %v1516 = vmul.f32 %v1508, 0.70710677
    %v1517 = vmul.f32 %v1511, 0.70710677
    %v1518 = verf.f32.pop %v1516
    %v1519 = verf.f32.pop %v1517
    %v1520 = vadd.f32 %v1518, 1.0
    %v1521 = vadd.f32 %v1519, 1.0
    %v1522 = vmul.f32 %v1514, %v1520
    %v1523 = vmul.f32 %v1515, %v1521
    %v1524 = vpack.c.bf16 %v1523, %v1522
    %v1525 = vld [vmem:[#allocation19] sm:$0xf]
    %v1526 = vld [vmem:[#allocation19 + $0x4] sm:$0xf]
    %v1527 = vld [vmem:[#allocation19 + $0x8] sm:$0xf]
    %v1528 = vld [vmem:[#allocation19 + $0xc] sm:$0xf]
    %v1529 = vld [vmem:[#allocation19 + $0x10] sm:$0xf]
    %v1530 = vld [vmem:[#allocation19 + $0x14] sm:$0xf]
    %v1531 = vld [vmem:[#allocation19 + $0x18] sm:$0xf]
    %v1532 = vld [vmem:[#allocation19 + $0x1c] sm:$0xf]
    %v1533 = vld [vmem:[#allocation20] sm:$0x1]
    %v1535 = vlaneseq
    %v1536 = vshrl.u32 %v1535, 7
    %v1537 = vsub.s32 0, %v1536
    %v1538 = vrot.slane %v1533, %v1537
    %v1548 = vunpack.c.l.b16 %v1525
    %v1549 = vunpack.c.l.b16 %v1526
    %v1550 = vunpack.c.l.b16 %v1527
    %v1551 = vunpack.c.l.b16 %v1528
    %v1552 = vunpack.c.l.b16 %v1529
    %v1553 = vunpack.c.l.b16 %v1530
    %v1554 = vunpack.c.l.b16 %v1531
    %v1555 = vunpack.c.l.b16 %v1532
    %v1556 = vpack.c.b16 %v1549, %v1548
    %v1557 = vpack.c.b16 %v1551, %v1550
    %v1558 = vpack.c.b16 %v1553, %v1552
    %v1559 = vpack.c.b16 %v1555, %v1554
    %vm1564 = vcmask 523264
    %v1566 = vsel %vm1564, %v1524, 0
    %1568 = vmatprep.subr.bf16.mxu0 0
    %1569 = vmatpush1.bf16.msra.mxu0 %v1556
    %1570 = vmatprep.subr.bf16.mxu0 0
    %1571 = vmatpush1.bf16.msra.mxu0 %v1557
    %1572 = vmatprep.subr.bf16.mxu0 0
    %1573 = vmatpush1.bf16.msra.mxu0 %v1558
    %1574 = vmatprep.subr.bf16.mxu0 0
    %1575 = vmatpush1.bf16.msra.mxu0 %v1559
    %1576 = vmatprep.subr.bf16.mxu0 0
    %1577 = vmatpush1.bf16.msra.mxu0 0
    %1578 = vmatprep.subr.bf16.mxu0 0
    %1579 = vmatpush1.bf16.msra.mxu0 0
    %1580 = vmatprep.subr.bf16.mxu0 0
    %1581 = vmatpush1.bf16.msra.mxu0 0
    %1582 = vmatprep.subr.bf16.mxu0 0
    %1583 = vmatpush1.bf16.msra.mxu0 0
    %1584 = vmatprep.subr.bf16.mxu0 0
    %1585 = vmatpush1.bf16.msra.mxu0 0
    %1586 = vmatprep.subr.bf16.mxu0 0
    %1587 = vmatpush1.bf16.msra.mxu0 0
    %1588 = vmatprep.subr.bf16.mxu0 0
    %1589 = vmatpush1.bf16.msra.mxu0 0
    %1590 = vmatprep.subr.bf16.mxu0 0
    %1591 = vmatpush1.bf16.msra.mxu0 0
    %1592 = vmatprep.subr.bf16.mxu0 0
    %1593 = vmatpush1.bf16.msra.mxu0 0
    %1594 = vmatprep.subr.bf16.mxu0 0
    %1595 = vmatpush1.bf16.msra.mxu0 0
    %1596 = vmatprep.subr.bf16.mxu0 0
    %1597 = vmatpush1.bf16.msra.mxu0 0
    %1598 = vmatprep.subr.bf16.mxu0 0
    %1599 = vmatpush1.bf16.msra.mxu0 0
    %1600 = vmatprep.mubr.bf16.mxu0 0
    %1601 = vmatmul.mubr.bf16.gmra.mrb[0].mxu0 %v1566
    %v1602 = vpop.f32.mrb[0].mxu0
    %v1603 = vadd.f32 %v1538, %v1602
    %v1604 = vpop.f32.mrb[0].mxu0
    %v1605 = vpop.f32.mrb[0].mxu0
    %v1606 = vadd.f32 %v1538, %v1605
    %v1607 = vpop.f32.mrb[0].mxu0
    %1608 = vdwg.mxu0
    %v1609 = vadd.f32 %v1414, %v1603
    %v1610 = vadd.f32 %v1415, %v1606
    %1611 = vst.msk [vmem:[#allocation22] sm:$0xff] %vm203, %v1609
    %1612 = vst.msk [vmem:[#allocation22 + $0x8] sm:$0xff] %vm203, %v1610
    // Predicated region
    $region98: #{tpu_custom_call.1} parent=1 // pred_check
      _
    $region99: #{tpu_custom_call.1} parent=1 // pred_check_branch
      %1614 = sbr.rel (0) target = $region101
    $region100: #{tpu_custom_call.1} parent=1 // pred_region
      %s1616 = ssub.s32 256, 256
      %1617 = vsyncadd [#allocation4], %s1616
      %s1618 = sshll.u32 [#allocation22], 4
      %s1619 = int_to_ptr.vmem [resolvable:$true] %s1618
      %1624 = dma.vmem_to_hbm [thread:$0]  %s1619, 256, %s12, [#allocation4], 128, 128, 8
    $region101: #{tpu_custom_call.1} parent=1 // pred_fallthru
      _
    // Predicated region
    $region102: #{tpu_custom_call.1} parent=1 // pred_check
      _
    $region103: #{tpu_custom_call.1} parent=1 // pred_check_branch
      %1626 = sbr.rel (0) target = $region105
    $region104: #{tpu_custom_call.1} parent=1 // pred_region
      %s1628 = ssub.s32 1024, 1024
      %1629 = vsyncadd [#allocation24], %s1628
      %s1630 = sshll.u32 [#allocation23], 4
      %s1631 = int_to_ptr.vmem [resolvable:$true] %s1630
      %1636 = dma.vmem_to_hbm [thread:$0]  %s1631, 1024, %s13, [#allocation24], 128, 128, 8
    $region105: #{tpu_custom_call.1} parent=1 // pred_fallthru
      _
    // Predicated region
    $region106: #{tpu_custom_call.1} parent=1 // pred_check
      _
    $region107: #{tpu_custom_call.1} parent=1 // pred_check_branch
      %1638 = sbr.rel (0) target = $region109
    $region108: #{tpu_custom_call.1} parent=1 // pred_region
      %1639 = dma.done [#allocation4], 256
    $region109: #{tpu_custom_call.1} parent=1 // pred_fallthru
      _
    // Predicated region
    $region110: #{tpu_custom_call.1} parent=1 // pred_check
      _
    $region111: #{tpu_custom_call.1} parent=1 // pred_check_branch
      %1641 = sbr.rel (0) target = $region113
    $region112: #{tpu_custom_call.1} parent=1 // pred_region
      %1642 = dma.done [#allocation24], 1024
    $region113: #{tpu_custom_call.1} parent=1 // pred_fallthru
      _
    %1643 = vsyncpa [#allocation3], 1
    %1644 = vsyncpa [#allocation6], 1
    %1645 = vsyncpa [#allocation9], 1
    %1646 = vsyncpa [#allocation12], 1
    %1647 = vsyncpa [#allocation15], 1
    %1648 = vsyncpa [#allocation18], 1
    %1649 = vsyncpa [#allocation21], 1
    %1650 = vsyncpa [#allocation4], 1
    %1651 = vsyncpa [#allocation24], 1

</llo_original>
